<compile_context>
chip_gen: v5e
topology: v5e:2x2
jax: 0.10.0
libtpu: 0.0.40
codegen_flags: <defaults>
</compile_context>

<pallas_src>
import functools

import numpy as np
import jax
import jax.numpy as jnp
from jax import lax
from jax.experimental import pallas as pl
from jax.experimental.pallas import tpu as pltpu


# ---------------------------------------------------------------------------
# Fused Pallas kernel: the entire T3cnn forward pass.
# ---------------------------------------------------------------------------
def _t3cnn_fused_kernel(x_ref,
                        r1_ref, s1_ref, b1_ref,
                        r2_ref, s2_ref, b2_ref,
                        r3_ref, s3_ref, b3_ref,
                        rsh_ref,
                        s4_ref, b4_ref,
                        s5_ref, b5_ref,
                        s6_ref, b6_ref,
                        s7_ref, b7_ref,
                        prow_ref, q_ref, bfc_ref,
                        out_ref):
    def mm(a, b):
        return jnp.dot(a, b, preferred_element_type=jnp.float32)

    def conv(y, r_ref, s_ref, b_ref, taps):
        # relu( sum_i R_i @ Y @ S_i + bias ); everything stays on-chip.
        acc = mm(mm(r_ref[0], y), s_ref[0])
        for t in range(1, taps):
            acc = acc + mm(mm(r_ref[t], y), s_ref[t])
        return jnp.maximum(acc + b_ref[...], 0.0)

    x = x_ref[...]                                   # (B*H0, W0)
    y1 = conv(x, r1_ref, s1_ref, b1_ref, 3)          # conv1 -> (B*H1, W1*8)
    y2 = conv(y1, r2_ref, s2_ref, b2_ref, 3)         # conv2 -> (B*H2, W2*16)
    y3 = conv(y2, r3_ref, s3_ref, b3_ref, 1)         # conv3 -> (B*H3, W3*32)
    y4 = conv(y3, rsh_ref, s4_ref, b4_ref, 3)        # bottleneck1 conv a
    y4 = conv(y4, rsh_ref, s5_ref, b5_ref, 3)        # bottleneck1 conv b
    y = y3 + y4                                      # residual add
    y5 = conv(y, rsh_ref, s6_ref, b6_ref, 3)         # bottleneck2 conv a
    y5 = conv(y5, rsh_ref, s7_ref, b7_ref, 3)        # bottleneck2 conv b -> (B*H3, W3*64)

    pooled = mm(prow_ref[...], y5)                   # per-batch spatial sum -> (B, W3*64)
    out_ref[...] = mm(pooled, q_ref[...]) + bfc_ref[...]   # 1/(H*W) folded into q; + fc bias


# ---------------------------------------------------------------------------
# One-time (outside jit) parameter / structure preparation.
# ---------------------------------------------------------------------------
def _row_gather(h_out, h_in, stride, offset, batch):
    """R[b*h_out+ho, b*h_in+hi] = 1 with hi = ho*stride + offset.
    Rows whose hi falls into padding stay all-zero. Block-diagonal over batch."""
    r = np.zeros((batch * h_out, batch * h_in), np.float32)
    for b in range(batch):
        for ho in range(h_out):
            hi = ho * stride + offset
            if 0 <= hi < h_in:
                r[b * h_out + ho, b * h_in + hi] = 1.0
    return r


def _fold_width_taps(w_torch, tap_i, w_in, w_out, stride_w, pad_w):
    """S_i[(wi,ci),(wo,co)] = sum_j [wi == wo*stride_w - pad_w + j] * W[co,ci,tap_i,j]."""
    w_np = np.asarray(w_torch, np.float32)
    cout, cin, _, kw = w_np.shape
    s = np.zeros((w_in * cin, w_out * cout), np.float32)
    for wo in range(w_out):
        for j in range(kw):
            wi = wo * stride_w - pad_w + j
            if 0 <= wi < w_in:
                s[wi * cin:(wi + 1) * cin, wo * cout:(wo + 1) * cout] += \
                    w_np[:, :, tap_i, j].T
    return s


def _bias_row(b_torch, w_out):
    # column layout is (w, c) with c minor -> tile the bias over the width.
    return np.tile(np.asarray(b_torch, np.float32), w_out)[None, :]


def prepare_operands(params, batch, h0, w0):
    """Build all constant operands for the fused kernel (hoisted out of jit)."""
    # Conv output geometry (PyTorch arithmetic).
    h1, w1 = h0 - 2, (w0 - 1) // 3 + 1                 # Conv2d(1,8,(3,1),stride=(1,3))
    h2, w2 = h1 - 2, (w1 - 1) // 3 + 1                 # Conv2d(8,16,(3,1),stride=(1,3))
    h3, w3 = (h2 + 1) // 2 + 1, (w2 + 1) // 2 + 1      # Conv2d(16,32,1,stride=2,pad=1)

    (w1c, b1c) = params["conv1"]
    (w2c, b2c) = params["conv2"]
    (w3c, b3c) = params["conv3"]
    (w4c, b4c) = params["bn1a"]
    (w5c, b5c) = params["bn1b"]
    (w6c, b6c) = params["bn2a"]
    (w7c, b7c) = params["bn2b"]
    fw, fb = params["fc"]                               # (20, 64), (20,) torch layout

    r1 = np.stack([_row_gather(h1, h0, 1, i, batch) for i in range(3)])
    s1 = np.stack([_fold_width_taps(w1c, i, w0, w1, 3, 0) for i in range(3)])
    r2 = np.stack([_row_gather(h2, h1, 1, i, batch) for i in range(3)])
    s2 = np.stack([_fold_width_taps(w2c, i, w1, w2, 3, 0) for i in range(3)])
    r3 = _row_gather(h3, h2, 2, -1, batch)[None]
    s3 = _fold_width_taps(w3c, 0, w2, w3, 2, 1)[None]
    # Shared height-shift matrices for every 3x3 / stride 1 / pad 1 conv.
    rsh = np.stack([_row_gather(h3, h3, 1, i - 1, batch) for i in range(3)])
    s4 = np.stack([_fold_width_taps(w4c, i, w3, w3, 1, 1) for i in range(3)])
    s5 = np.stack([_fold_width_taps(w5c, i, w3, w3, 1, 1) for i in range(3)])
    s6 = np.stack([_fold_width_taps(w6c, i, w3, w3, 1, 1) for i in range(3)])
    s7 = np.stack([_fold_width_taps(w7c, i, w3, w3, 1, 1) for i in range(3)])

    # Global average pool (left) + fc (right, pre-scaled by 1/(H3*W3)).
    prow = np.zeros((batch, batch * h3), np.float32)
    for b in range(batch):
        prow[b, b * h3:(b + 1) * h3] = 1.0
    q = np.tile(np.asarray(fw, np.float32).T / float(h3 * w3), (w3, 1))   # (W3*64, 20)
    bfc = np.asarray(fb, np.float32)[None, :]

    operands = (
        r1, s1, _bias_row(b1c, w1),
        r2, s2, _bias_row(b2c, w2),
        r3, s3, _bias_row(b3c, w3),
        rsh,
        s4, _bias_row(b4c, w3),
        s5, _bias_row(b5c, w3),
        s6, _bias_row(b6c, w3),
        s7, _bias_row(b7c, w3),
        prow, q, bfc,
    )

    # Advisory cost estimate for XLA's scheduler.
    def pair_flops(r, s, taps):
        m, k = r.shape[-2], r.shape[-1]
        ci, co = s.shape[-2], s.shape[-1]
        return taps * 2 * (m * k * ci + m * ci * co)

    flops = (pair_flops(r1, s1, 3) + pair_flops(r2, s2, 3) + pair_flops(r3, s3, 1)
             + sum(pair_flops(rsh, s, 3) for s in (s4, s5, s6, s7))
             + 2 * batch * (batch * h3) * (w3 * 64)
             + 2 * batch * (w3 * 64) * q.shape[-1])
    bytes_accessed = (sum(a.size for a in operands)
                      + batch * h0 * w0 + batch * q.shape[-1]) * 4
    cost = pl.CostEstimate(flops=int(flops), transcendentals=0,
                           bytes_accessed=int(bytes_accessed))

    return tuple(jnp.asarray(a) for a in operands), cost


# ---------------------------------------------------------------------------
# Forward wrapper: exactly one pallas_call.
# ---------------------------------------------------------------------------
def _full_block_spec(shape):
    ndim = len(shape)

    def index_map(i):
        return (0,) * ndim

    return pl.BlockSpec(shape, index_map)


def t3cnn_forward(operands, cost, x):
    b, h0, w0 = x.shape
    x2d = x.reshape(b * h0, w0).astype(jnp.float32)
    num_classes = operands[-1].shape[-1]
    inputs = (x2d,) + tuple(operands)

    return pl.pallas_call(
        _t3cnn_fused_kernel,
        grid=(1,),
        in_specs=[_full_block_spec(a.shape) for a in inputs],
        out_specs=pl.BlockSpec((b, num_classes), lambda i: (0, 0)),
        out_shape=jax.ShapeDtypeStruct((b, num_classes), jnp.float32),
        compiler_params=pltpu.CompilerParams(dimension_semantics=("arbitrary",)),
        cost_estimate=cost,
    )(*inputs)


# ---------------------------------------------------------------------------
# Parameters (PyTorch layouts) and a pure-JAX reference for checking.
# ---------------------------------------------------------------------------
def init_params(key):
    def conv_p(k, cout, cin, kh, kw):
        k1, k2 = jax.random.split(k)
        w = jax.random.normal(k1, (cout, cin, kh, kw), jnp.float32) * 0.1
        b = jax.random.normal(k2, (cout,), jnp.float32) * 0.1
        return w, b

    keys = jax.random.split(key, 8)
    params = {
        "conv1": conv_p(keys[0], 8, 1, 3, 1),
        "conv2": conv_p(keys[1], 16, 8, 3, 1),
        "conv3": conv_p(keys[2], 32, 16, 1, 1),
        "bn1a": conv_p(keys[3], 32, 32, 3, 3),
        "bn1b": conv_p(keys[4], 32, 32, 3, 3),
        "bn2a": conv_p(keys[5], 64, 32, 3, 3),
        "bn2b": conv_p(keys[6], 64, 64, 3, 3),
    }
    kf1, kf2 = jax.random.split(keys[7])
    params["fc"] = (
        jax.random.normal(kf1, (20, 64), jnp.float32) * 0.1,   # torch (out, in)
        jax.random.normal(kf2, (20,), jnp.float32) * 0.1,
    )
    return params


def _conv_relu_ref(x, w, b, stride, padding):
    y = lax.conv_general_dilated(
        x, w, window_strides=stride,
        padding=[(padding[0], padding[0]), (padding[1], padding[1])],
        dimension_numbers=("NCHW", "OIHW", "NCHW"),
        precision=lax.Precision.HIGHEST)
    return jnp.maximum(y + b[None, :, None, None], 0.0)


def t3cnn_reference(params, x):
    x = x[:, None, :, :]                                       # (B,1,H,W)
    x1 = _conv_relu_ref(x, *params["conv1"], (1, 3), (0, 0))
    x2 = _conv_relu_ref(x1, *params["conv2"], (1, 3), (0, 0))
    x3 = _conv_relu_ref(x2, *params["conv3"], (2, 2), (1, 1))
    x4 = _conv_relu_ref(x3, *params["bn1a"], (1, 1), (1, 1))
    x4 = _conv_relu_ref(x4, *params["bn1b"], (1, 1), (1, 1))
    x5 = _conv_relu_ref(x3 + x4, *params["bn2a"], (1, 1), (1, 1))
    x5 = _conv_relu_ref(x5, *params["bn2b"], (1, 1), (1, 1))
    pooled = jnp.mean(x5, axis=(2, 3))
    fw, fb = params["fc"]
    return jnp.dot(pooled, fw.T, precision=lax.Precision.HIGHEST) + fb


if __name__ == "__main__":
    key = jax.random.PRNGKey(0)
    kp, kx = jax.random.split(key)
    params = init_params(kp)

    B, H, W = 2, 16, 16
    x = jax.random.normal(kx, (B, H, W), jnp.float32)          # (B, H, W)

    # One-time weight / structure prep (hoisted out of the jitted forward).
    operands, cost = prepare_operands(params, B, H, W)

    fwd = jax.jit(functools.partial(t3cnn_forward, operands, cost))
    out = jax.block_until_ready(fwd(x))
    assert out.shape == (B, 20) and out.dtype == jnp.float32

    # Numerical check against a pure-JAX (XLA conv) reference of the module.
    ref = jax.block_until_ready(jax.jit(t3cnn_reference)(params, x))
    np.testing.assert_allclose(np.asarray(out), np.asarray(ref),
                               rtol=2e-2, atol=2e-3)

    print("KERNEL_OK")
</pallas_src>

<mosaic_0001>
module attributes {stable_mosaic.version = 11 : i64} {
  func.func @_t3cnn_fused_kernel(%arg0: i32, %arg1: memref<32x16xf32, #tpu.memory_space<vmem>>, %arg2: memref<3x28x32xf32, #tpu.memory_space<vmem>>, %arg3: memref<3x16x48xf32, #tpu.memory_space<vmem>>, %arg4: memref<1x48xf32, #tpu.memory_space<vmem>>, %arg5: memref<3x24x28xf32, #tpu.memory_space<vmem>>, %arg6: memref<3x48x32xf32, #tpu.memory_space<vmem>>, %arg7: memref<1x32xf32, #tpu.memory_space<vmem>>, %arg8: memref<1x14x24xf32, #tpu.memory_space<vmem>>, %arg9: memref<1x32x64xf32, #tpu.memory_space<vmem>>, %arg10: memref<1x64xf32, #tpu.memory_space<vmem>>, %arg11: memref<3x14x14xf32, #tpu.memory_space<vmem>>, %arg12: memref<3x64x64xf32, #tpu.memory_space<vmem>>, %arg13: memref<1x64xf32, #tpu.memory_space<vmem>>, %arg14: memref<3x64x64xf32, #tpu.memory_space<vmem>>, %arg15: memref<1x64xf32, #tpu.memory_space<vmem>>, %arg16: memref<3x64x128xf32, #tpu.memory_space<vmem>>, %arg17: memref<1x128xf32, #tpu.memory_space<vmem>>, %arg18: memref<3x128x128xf32, #tpu.memory_space<vmem>>, %arg19: memref<1x128xf32, #tpu.memory_space<vmem>>, %arg20: memref<2x14xf32, #tpu.memory_space<vmem>>, %arg21: memref<128x20xf32, #tpu.memory_space<vmem>>, %arg22: memref<1x20xf32, #tpu.memory_space<vmem>>, %arg23: memref<2x20xf32, #tpu.memory_space<vmem>>) attributes {dimension_semantics = [#tpu.dimension_semantics<arbitrary>], iteration_bounds = array<i64: 1>, scalar_prefetch = 0 : i64, scratch_operands = 0 : i64, tpu.core_type = #tpu.core_type<tc>, window_params = [{pipeline_mode = #tpu.pipeline_mode<synchronous>, transform_indices = @transform_0, window_bounds = array<i64: 32, 16>}, {pipeline_mode = #tpu.pipeline_mode<synchronous>, transform_indices = @transform_1, window_bounds = array<i64: 3, 28, 32>}, {pipeline_mode = #tpu.pipeline_mode<synchronous>, transform_indices = @transform_2, window_bounds = array<i64: 3, 16, 48>}, {pipeline_mode = #tpu.pipeline_mode<synchronous>, transform_indices = @transform_3, window_bounds = array<i64: 1, 48>}, {pipeline_mode = #tpu.pipeline_mode<synchronous>, transform_indices = @transform_4, window_bounds = array<i64: 3, 24, 28>}, {pipeline_mode = #tpu.pipeline_mode<synchronous>, transform_indices = @transform_5, window_bounds = array<i64: 3, 48, 32>}, {pipeline_mode = #tpu.pipeline_mode<synchronous>, transform_indices = @transform_6, window_bounds = array<i64: 1, 32>}, {pipeline_mode = #tpu.pipeline_mode<synchronous>, transform_indices = @transform_7, window_bounds = array<i64: 1, 14, 24>}, {pipeline_mode = #tpu.pipeline_mode<synchronous>, transform_indices = @transform_8, window_bounds = array<i64: 1, 32, 64>}, {pipeline_mode = #tpu.pipeline_mode<synchronous>, transform_indices = @transform_9, window_bounds = array<i64: 1, 64>}, {pipeline_mode = #tpu.pipeline_mode<synchronous>, transform_indices = @transform_10, window_bounds = array<i64: 3, 14, 14>}, {pipeline_mode = #tpu.pipeline_mode<synchronous>, transform_indices = @transform_11, window_bounds = array<i64: 3, 64, 64>}, {pipeline_mode = #tpu.pipeline_mode<synchronous>, transform_indices = @transform_12, window_bounds = array<i64: 1, 64>}, {pipeline_mode = #tpu.pipeline_mode<synchronous>, transform_indices = @transform_13, window_bounds = array<i64: 3, 64, 64>}, {pipeline_mode = #tpu.pipeline_mode<synchronous>, transform_indices = @transform_14, window_bounds = array<i64: 1, 64>}, {pipeline_mode = #tpu.pipeline_mode<synchronous>, transform_indices = @transform_15, window_bounds = array<i64: 3, 64, 128>}, {pipeline_mode = #tpu.pipeline_mode<synchronous>, transform_indices = @transform_16, window_bounds = array<i64: 1, 128>}, {pipeline_mode = #tpu.pipeline_mode<synchronous>, transform_indices = @transform_17, window_bounds = array<i64: 3, 128, 128>}, {pipeline_mode = #tpu.pipeline_mode<synchronous>, transform_indices = @transform_18, window_bounds = array<i64: 1, 128>}, {pipeline_mode = #tpu.pipeline_mode<synchronous>, transform_indices = @transform_19, window_bounds = array<i64: 2, 14>}, {pipeline_mode = #tpu.pipeline_mode<synchronous>, transform_indices = @transform_20, window_bounds = array<i64: 128, 20>}, {pipeline_mode = #tpu.pipeline_mode<synchronous>, transform_indices = @transform_21, window_bounds = array<i64: 1, 20>}, {pipeline_mode = #tpu.pipeline_mode<synchronous>, transform_indices = @transform_22, window_bounds = array<i64: 2, 20>}]} {
    %c0 = arith.constant 0 : index
    %c0_0 = arith.constant 0 : index
    %0 = vector.load %arg1[%c0, %c0_0] : memref<32x16xf32, #tpu.memory_space<vmem>>, vector<32x16xf32>
    %c0_1 = arith.constant 0 : index
    %c0_2 = arith.constant 0 : index
    %c0_3 = arith.constant 0 : index
    %1 = vector.load %arg2[%c0_1, %c0_2, %c0_3] : memref<3x28x32xf32, #tpu.memory_space<vmem>>, vector<1x28x32xf32>
    %2 = vector.shape_cast %1 : vector<1x28x32xf32> to vector<28x32xf32>
    %cst = arith.constant dense<0.000000e+00> : vector<28x16xf32>
    %3 = tpu.matmul %2, %0, %cst {dimension_numbers = #tpu.dot_dimension_numbers<[1], [0], [0], [1], [0, 0, 1, 1], [], []>} : vector<28x32xf32>, vector<32x16xf32>, vector<28x16xf32> -> vector<28x16xf32>
    %c0_4 = arith.constant 0 : index
    %c0_5 = arith.constant 0 : index
    %c0_6 = arith.constant 0 : index
    %4 = vector.load %arg3[%c0_4, %c0_5, %c0_6] : memref<3x16x48xf32, #tpu.memory_space<vmem>>, vector<1x16x48xf32>
    %5 = vector.shape_cast %4 : vector<1x16x48xf32> to vector<16x48xf32>
    %cst_7 = arith.constant dense<0.000000e+00> : vector<28x48xf32>
    %6 = tpu.matmul %3, %5, %cst_7 {dimension_numbers = #tpu.dot_dimension_numbers<[1], [0], [0], [1], [0, 0, 1, 1], [], []>} : vector<28x16xf32>, vector<16x48xf32>, vector<28x48xf32> -> vector<28x48xf32>
    %c1 = arith.constant 1 : index
    %c0_8 = arith.constant 0 : index
    %c0_9 = arith.constant 0 : index
    %7 = vector.load %arg2[%c1, %c0_8, %c0_9] : memref<3x28x32xf32, #tpu.memory_space<vmem>>, vector<1x28x32xf32>
    %8 = vector.shape_cast %7 : vector<1x28x32xf32> to vector<28x32xf32>
    %cst_10 = arith.constant dense<0.000000e+00> : vector<28x16xf32>
    %9 = tpu.matmul %8, %0, %cst_10 {dimension_numbers = #tpu.dot_dimension_numbers<[1], [0], [0], [1], [0, 0, 1, 1], [], []>} : vector<28x32xf32>, vector<32x16xf32>, vector<28x16xf32> -> vector<28x16xf32>
    %c1_11 = arith.constant 1 : index
    %c0_12 = arith.constant 0 : index
    %c0_13 = arith.constant 0 : index
    %10 = vector.load %arg3[%c1_11, %c0_12, %c0_13] : memref<3x16x48xf32, #tpu.memory_space<vmem>>, vector<1x16x48xf32>
    %11 = vector.shape_cast %10 : vector<1x16x48xf32> to vector<16x48xf32>
    %cst_14 = arith.constant dense<0.000000e+00> : vector<28x48xf32>
    %12 = tpu.matmul %9, %11, %cst_14 {dimension_numbers = #tpu.dot_dimension_numbers<[1], [0], [0], [1], [0, 0, 1, 1], [], []>} : vector<28x16xf32>, vector<16x48xf32>, vector<28x48xf32> -> vector<28x48xf32>
    %13 = arith.addf %6, %12 : vector<28x48xf32>
    %c2 = arith.constant 2 : index
    %c0_15 = arith.constant 0 : index
    %c0_16 = arith.constant 0 : index
    %14 = vector.load %arg2[%c2, %c0_15, %c0_16] : memref<3x28x32xf32, #tpu.memory_space<vmem>>, vector<1x28x32xf32>
    %15 = vector.shape_cast %14 : vector<1x28x32xf32> to vector<28x32xf32>
    %cst_17 = arith.constant dense<0.000000e+00> : vector<28x16xf32>
    %16 = tpu.matmul %15, %0, %cst_17 {dimension_numbers = #tpu.dot_dimension_numbers<[1], [0], [0], [1], [0, 0, 1, 1], [], []>} : vector<28x32xf32>, vector<32x16xf32>, vector<28x16xf32> -> vector<28x16xf32>
    %c2_18 = arith.constant 2 : index
    %c0_19 = arith.constant 0 : index
    %c0_20 = arith.constant 0 : index
    %17 = vector.load %arg3[%c2_18, %c0_19, %c0_20] : memref<3x16x48xf32, #tpu.memory_space<vmem>>, vector<1x16x48xf32>
    %18 = vector.shape_cast %17 : vector<1x16x48xf32> to vector<16x48xf32>
    %cst_21 = arith.constant dense<0.000000e+00> : vector<28x48xf32>
    %19 = tpu.matmul %16, %18, %cst_21 {dimension_numbers = #tpu.dot_dimension_numbers<[1], [0], [0], [1], [0, 0, 1, 1], [], []>} : vector<28x16xf32>, vector<16x48xf32>, vector<28x48xf32> -> vector<28x48xf32>
    %20 = arith.addf %13, %19 : vector<28x48xf32>
    %c0_22 = arith.constant 0 : index
    %c0_23 = arith.constant 0 : index
    %21 = vector.load %arg4[%c0_22, %c0_23] : memref<1x48xf32, #tpu.memory_space<vmem>>, vector<1x48xf32>
    %22 = vector.broadcast %21 : vector<1x48xf32> to vector<28x48xf32>
    %23 = arith.addf %20, %22 : vector<28x48xf32>
    %cst_24 = arith.constant 0.000000e+00 : f32
    %24 = vector.broadcast %cst_24 : f32 to vector<28x48xf32>
    %25 = arith.maximumf %23, %24 : vector<28x48xf32>
    %c0_25 = arith.constant 0 : index
    %c0_26 = arith.constant 0 : index
    %c0_27 = arith.constant 0 : index
    %26 = vector.load %arg5[%c0_25, %c0_26, %c0_27] : memref<3x24x28xf32, #tpu.memory_space<vmem>>, vector<1x24x28xf32>
    %27 = vector.shape_cast %26 : vector<1x24x28xf32> to vector<24x28xf32>
    %cst_28 = arith.constant dense<0.000000e+00> : vector<24x48xf32>
    %28 = tpu.matmul %27, %25, %cst_28 {dimension_numbers = #tpu.dot_dimension_numbers<[1], [0], [0], [1], [0, 0, 1, 1], [], []>} : vector<24x28xf32>, vector<28x48xf32>, vector<24x48xf32> -> vector<24x48xf32>
    %c0_29 = arith.constant 0 : index
    %c0_30 = arith.constant 0 : index
    %c0_31 = arith.constant 0 : index
    %29 = vector.load %arg6[%c0_29, %c0_30, %c0_31] : memref<3x48x32xf32, #tpu.memory_space<vmem>>, vector<1x48x32xf32>
    %30 = vector.shape_cast %29 : vector<1x48x32xf32> to vector<48x32xf32>
    %cst_32 = arith.constant dense<0.000000e+00> : vector<24x32xf32>
    %31 = tpu.matmul %28, %30, %cst_32 {dimension_numbers = #tpu.dot_dimension_numbers<[1], [0], [0], [1], [0, 0, 1, 1], [], []>} : vector<24x48xf32>, vector<48x32xf32>, vector<24x32xf32> -> vector<24x32xf32>
    %c1_33 = arith.constant 1 : index
    %c0_34 = arith.constant 0 : index
    %c0_35 = arith.constant 0 : index
    %32 = vector.load %arg5[%c1_33, %c0_34, %c0_35] : memref<3x24x28xf32, #tpu.memory_space<vmem>>, vector<1x24x28xf32>
    %33 = vector.shape_cast %32 : vector<1x24x28xf32> to vector<24x28xf32>
    %cst_36 = arith.constant dense<0.000000e+00> : vector<24x48xf32>
    %34 = tpu.matmul %33, %25, %cst_36 {dimension_numbers = #tpu.dot_dimension_numbers<[1], [0], [0], [1], [0, 0, 1, 1], [], []>} : vector<24x28xf32>, vector<28x48xf32>, vector<24x48xf32> -> vector<24x48xf32>
    %c1_37 = arith.constant 1 : index
    %c0_38 = arith.constant 0 : index
    %c0_39 = arith.constant 0 : index
    %35 = vector.load %arg6[%c1_37, %c0_38, %c0_39] : memref<3x48x32xf32, #tpu.memory_space<vmem>>, vector<1x48x32xf32>
    %36 = vector.shape_cast %35 : vector<1x48x32xf32> to vector<48x32xf32>
    %cst_40 = arith.constant dense<0.000000e+00> : vector<24x32xf32>
    %37 = tpu.matmul %34, %36, %cst_40 {dimension_numbers = #tpu.dot_dimension_numbers<[1], [0], [0], [1], [0, 0, 1, 1], [], []>} : vector<24x48xf32>, vector<48x32xf32>, vector<24x32xf32> -> vector<24x32xf32>
    %38 = arith.addf %31, %37 : vector<24x32xf32>
    %c2_41 = arith.constant 2 : index
    %c0_42 = arith.constant 0 : index
    %c0_43 = arith.constant 0 : index
    %39 = vector.load %arg5[%c2_41, %c0_42, %c0_43] : memref<3x24x28xf32, #tpu.memory_space<vmem>>, vector<1x24x28xf32>
    %40 = vector.shape_cast %39 : vector<1x24x28xf32> to vector<24x28xf32>
    %cst_44 = arith.constant dense<0.000000e+00> : vector<24x48xf32>
    %41 = tpu.matmul %40, %25, %cst_44 {dimension_numbers = #tpu.dot_dimension_numbers<[1], [0], [0], [1], [0, 0, 1, 1], [], []>} : vector<24x28xf32>, vector<28x48xf32>, vector<24x48xf32> -> vector<24x48xf32>
    %c2_45 = arith.constant 2 : index
    %c0_46 = arith.constant 0 : index
    %c0_47 = arith.constant 0 : index
    %42 = vector.load %arg6[%c2_45, %c0_46, %c0_47] : memref<3x48x32xf32, #tpu.memory_space<vmem>>, vector<1x48x32xf32>
    %43 = vector.shape_cast %42 : vector<1x48x32xf32> to vector<48x32xf32>
    %cst_48 = arith.constant dense<0.000000e+00> : vector<24x32xf32>
    %44 = tpu.matmul %41, %43, %cst_48 {dimension_numbers = #tpu.dot_dimension_numbers<[1], [0], [0], [1], [0, 0, 1, 1], [], []>} : vector<24x48xf32>, vector<48x32xf32>, vector<24x32xf32> -> vector<24x32xf32>
    %45 = arith.addf %38, %44 : vector<24x32xf32>
    %c0_49 = arith.constant 0 : index
    %c0_50 = arith.constant 0 : index
    %46 = vector.load %arg7[%c0_49, %c0_50] : memref<1x32xf32, #tpu.memory_space<vmem>>, vector<1x32xf32>
    %47 = vector.broadcast %46 : vector<1x32xf32> to vector<24x32xf32>
    %48 = arith.addf %45, %47 : vector<24x32xf32>
    %cst_51 = arith.constant 0.000000e+00 : f32
    %49 = vector.broadcast %cst_51 : f32 to vector<24x32xf32>
    %50 = arith.maximumf %48, %49 : vector<24x32xf32>
    %c0_52 = arith.constant 0 : index
    %c0_53 = arith.constant 0 : index
    %c0_54 = arith.constant 0 : index
    %51 = vector.load %arg8[%c0_52, %c0_53, %c0_54] : memref<1x14x24xf32, #tpu.memory_space<vmem>>, vector<1x14x24xf32>
    %52 = vector.shape_cast %51 : vector<1x14x24xf32> to vector<14x24xf32>
    %cst_55 = arith.constant dense<0.000000e+00> : vector<14x32xf32>
    %53 = tpu.matmul %52, %50, %cst_55 {dimension_numbers = #tpu.dot_dimension_numbers<[1], [0], [0], [1], [0, 0, 1, 1], [], []>} : vector<14x24xf32>, vector<24x32xf32>, vector<14x32xf32> -> vector<14x32xf32>
    %c0_56 = arith.constant 0 : index
    %c0_57 = arith.constant 0 : index
    %c0_58 = arith.constant 0 : index
    %54 = vector.load %arg9[%c0_56, %c0_57, %c0_58] : memref<1x32x64xf32, #tpu.memory_space<vmem>>, vector<1x32x64xf32>
    %55 = vector.shape_cast %54 : vector<1x32x64xf32> to vector<32x64xf32>
    %cst_59 = arith.constant dense<0.000000e+00> : vector<14x64xf32>
    %56 = tpu.matmul %53, %55, %cst_59 {dimension_numbers = #tpu.dot_dimension_numbers<[1], [0], [0], [1], [0, 0, 1, 1], [], []>} : vector<14x32xf32>, vector<32x64xf32>, vector<14x64xf32> -> vector<14x64xf32>
    %c0_60 = arith.constant 0 : index
    %c0_61 = arith.constant 0 : index
    %57 = vector.load %arg10[%c0_60, %c0_61] : memref<1x64xf32, #tpu.memory_space<vmem>>, vector<1x64xf32>
    %58 = vector.broadcast %57 : vector<1x64xf32> to vector<14x64xf32>
    %59 = arith.addf %56, %58 : vector<14x64xf32>
    %cst_62 = arith.constant 0.000000e+00 : f32
    %60 = vector.broadcast %cst_62 : f32 to vector<14x64xf32>
    %61 = arith.maximumf %59, %60 : vector<14x64xf32>
    %c0_63 = arith.constant 0 : index
    %c0_64 = arith.constant 0 : index
    %c0_65 = arith.constant 0 : index
    %62 = vector.load %arg11[%c0_63, %c0_64, %c0_65] : memref<3x14x14xf32, #tpu.memory_space<vmem>>, vector<1x14x14xf32>
    %63 = vector.shape_cast %62 : vector<1x14x14xf32> to vector<14x14xf32>
    %cst_66 = arith.constant dense<0.000000e+00> : vector<14x64xf32>
    %64 = tpu.matmul %63, %61, %cst_66 {dimension_numbers = #tpu.dot_dimension_numbers<[1], [0], [0], [1], [0, 0, 1, 1], [], []>} : vector<14x14xf32>, vector<14x64xf32>, vector<14x64xf32> -> vector<14x64xf32>
    %c0_67 = arith.constant 0 : index
    %c0_68 = arith.constant 0 : index
    %c0_69 = arith.constant 0 : index
    %65 = vector.load %arg12[%c0_67, %c0_68, %c0_69] : memref<3x64x64xf32, #tpu.memory_space<vmem>>, vector<1x64x64xf32>
    %66 = vector.shape_cast %65 : vector<1x64x64xf32> to vector<64x64xf32>
    %cst_70 = arith.constant dense<0.000000e+00> : vector<14x64xf32>
    %67 = tpu.matmul %64, %66, %cst_70 {dimension_numbers = #tpu.dot_dimension_numbers<[1], [0], [0], [1], [0, 0, 1, 1], [], []>} : vector<14x64xf32>, vector<64x64xf32>, vector<14x64xf32> -> vector<14x64xf32>
    %c1_71 = arith.constant 1 : index
    %c0_72 = arith.constant 0 : index
    %c0_73 = arith.constant 0 : index
    %68 = vector.load %arg11[%c1_71, %c0_72, %c0_73] : memref<3x14x14xf32, #tpu.memory_space<vmem>>, vector<1x14x14xf32>
    %69 = vector.shape_cast %68 : vector<1x14x14xf32> to vector<14x14xf32>
    %cst_74 = arith.constant dense<0.000000e+00> : vector<14x64xf32>
    %70 = tpu.matmul %69, %61, %cst_74 {dimension_numbers = #tpu.dot_dimension_numbers<[1], [0], [0], [1], [0, 0, 1, 1], [], []>} : vector<14x14xf32>, vector<14x64xf32>, vector<14x64xf32> -> vector<14x64xf32>
    %c1_75 = arith.constant 1 : index
    %c0_76 = arith.constant 0 : index
    %c0_77 = arith.constant 0 : index
    %71 = vector.load %arg12[%c1_75, %c0_76, %c0_77] : memref<3x64x64xf32, #tpu.memory_space<vmem>>, vector<1x64x64xf32>
    %72 = vector.shape_cast %71 : vector<1x64x64xf32> to vector<64x64xf32>
    %cst_78 = arith.constant dense<0.000000e+00> : vector<14x64xf32>
    %73 = tpu.matmul %70, %72, %cst_78 {dimension_numbers = #tpu.dot_dimension_numbers<[1], [0], [0], [1], [0, 0, 1, 1], [], []>} : vector<14x64xf32>, vector<64x64xf32>, vector<14x64xf32> -> vector<14x64xf32>
    %74 = arith.addf %67, %73 : vector<14x64xf32>
    %c2_79 = arith.constant 2 : index
    %c0_80 = arith.constant 0 : index
    %c0_81 = arith.constant 0 : index
    %75 = vector.load %arg11[%c2_79, %c0_80, %c0_81] : memref<3x14x14xf32, #tpu.memory_space<vmem>>, vector<1x14x14xf32>
    %76 = vector.shape_cast %75 : vector<1x14x14xf32> to vector<14x14xf32>
    %cst_82 = arith.constant dense<0.000000e+00> : vector<14x64xf32>
    %77 = tpu.matmul %76, %61, %cst_82 {dimension_numbers = #tpu.dot_dimension_numbers<[1], [0], [0], [1], [0, 0, 1, 1], [], []>} : vector<14x14xf32>, vector<14x64xf32>, vector<14x64xf32> -> vector<14x64xf32>
    %c2_83 = arith.constant 2 : index
    %c0_84 = arith.constant 0 : index
    %c0_85 = arith.constant 0 : index
    %78 = vector.load %arg12[%c2_83, %c0_84, %c0_85] : memref<3x64x64xf32, #tpu.memory_space<vmem>>, vector<1x64x64xf32>
    %79 = vector.shape_cast %78 : vector<1x64x64xf32> to vector<64x64xf32>
    %cst_86 = arith.constant dense<0.000000e+00> : vector<14x64xf32>
    %80 = tpu.matmul %77, %79, %cst_86 {dimension_numbers = #tpu.dot_dimension_numbers<[1], [0], [0], [1], [0, 0, 1, 1], [], []>} : vector<14x64xf32>, vector<64x64xf32>, vector<14x64xf32> -> vector<14x64xf32>
    %81 = arith.addf %74, %80 : vector<14x64xf32>
    %c0_87 = arith.constant 0 : index
    %c0_88 = arith.constant 0 : index
    %82 = vector.load %arg13[%c0_87, %c0_88] : memref<1x64xf32, #tpu.memory_space<vmem>>, vector<1x64xf32>
    %83 = vector.broadcast %82 : vector<1x64xf32> to vector<14x64xf32>
    %84 = arith.addf %81, %83 : vector<14x64xf32>
    %cst_89 = arith.constant 0.000000e+00 : f32
    %85 = vector.broadcast %cst_89 : f32 to vector<14x64xf32>
    %86 = arith.maximumf %84, %85 : vector<14x64xf32>
    %c0_90 = arith.constant 0 : index
    %c0_91 = arith.constant 0 : index
    %c0_92 = arith.constant 0 : index
    %87 = vector.load %arg11[%c0_90, %c0_91, %c0_92] : memref<3x14x14xf32, #tpu.memory_space<vmem>>, vector<1x14x14xf32>
    %88 = vector.shape_cast %87 : vector<1x14x14xf32> to vector<14x14xf32>
    %cst_93 = arith.constant dense<0.000000e+00> : vector<14x64xf32>
    %89 = tpu.matmul %88, %86, %cst_93 {dimension_numbers = #tpu.dot_dimension_numbers<[1], [0], [0], [1], [0, 0, 1, 1], [], []>} : vector<14x14xf32>, vector<14x64xf32>, vector<14x64xf32> -> vector<14x64xf32>
    %c0_94 = arith.constant 0 : index
    %c0_95 = arith.constant 0 : index
    %c0_96 = arith.constant 0 : index
    %90 = vector.load %arg14[%c0_94, %c0_95, %c0_96] : memref<3x64x64xf32, #tpu.memory_space<vmem>>, vector<1x64x64xf32>
    %91 = vector.shape_cast %90 : vector<1x64x64xf32> to vector<64x64xf32>
    %cst_97 = arith.constant dense<0.000000e+00> : vector<14x64xf32>
    %92 = tpu.matmul %89, %91, %cst_97 {dimension_numbers = #tpu.dot_dimension_numbers<[1], [0], [0], [1], [0, 0, 1, 1], [], []>} : vector<14x64xf32>, vector<64x64xf32>, vector<14x64xf32> -> vector<14x64xf32>
    %c1_98 = arith.constant 1 : index
    %c0_99 = arith.constant 0 : index
    %c0_100 = arith.constant 0 : index
    %93 = vector.load %arg11[%c1_98, %c0_99, %c0_100] : memref<3x14x14xf32, #tpu.memory_space<vmem>>, vector<1x14x14xf32>
    %94 = vector.shape_cast %93 : vector<1x14x14xf32> to vector<14x14xf32>
    %cst_101 = arith.constant dense<0.000000e+00> : vector<14x64xf32>
    %95 = tpu.matmul %94, %86, %cst_101 {dimension_numbers = #tpu.dot_dimension_numbers<[1], [0], [0], [1], [0, 0, 1, 1], [], []>} : vector<14x14xf32>, vector<14x64xf32>, vector<14x64xf32> -> vector<14x64xf32>
    %c1_102 = arith.constant 1 : index
    %c0_103 = arith.constant 0 : index
    %c0_104 = arith.constant 0 : index
    %96 = vector.load %arg14[%c1_102, %c0_103, %c0_104] : memref<3x64x64xf32, #tpu.memory_space<vmem>>, vector<1x64x64xf32>
    %97 = vector.shape_cast %96 : vector<1x64x64xf32> to vector<64x64xf32>
    %cst_105 = arith.constant dense<0.000000e+00> : vector<14x64xf32>
    %98 = tpu.matmul %95, %97, %cst_105 {dimension_numbers = #tpu.dot_dimension_numbers<[1], [0], [0], [1], [0, 0, 1, 1], [], []>} : vector<14x64xf32>, vector<64x64xf32>, vector<14x64xf32> -> vector<14x64xf32>
    %99 = arith.addf %92, %98 : vector<14x64xf32>
    %c2_106 = arith.constant 2 : index
    %c0_107 = arith.constant 0 : index
    %c0_108 = arith.constant 0 : index
    %100 = vector.load %arg11[%c2_106, %c0_107, %c0_108] : memref<3x14x14xf32, #tpu.memory_space<vmem>>, vector<1x14x14xf32>
    %101 = vector.shape_cast %100 : vector<1x14x14xf32> to vector<14x14xf32>
    %cst_109 = arith.constant dense<0.000000e+00> : vector<14x64xf32>
    %102 = tpu.matmul %101, %86, %cst_109 {dimension_numbers = #tpu.dot_dimension_numbers<[1], [0], [0], [1], [0, 0, 1, 1], [], []>} : vector<14x14xf32>, vector<14x64xf32>, vector<14x64xf32> -> vector<14x64xf32>
    %c2_110 = arith.constant 2 : index
    %c0_111 = arith.constant 0 : index
    %c0_112 = arith.constant 0 : index
    %103 = vector.load %arg14[%c2_110, %c0_111, %c0_112] : memref<3x64x64xf32, #tpu.memory_space<vmem>>, vector<1x64x64xf32>
    %104 = vector.shape_cast %103 : vector<1x64x64xf32> to vector<64x64xf32>
    %cst_113 = arith.constant dense<0.000000e+00> : vector<14x64xf32>
    %105 = tpu.matmul %102, %104, %cst_113 {dimension_numbers = #tpu.dot_dimension_numbers<[1], [0], [0], [1], [0, 0, 1, 1], [], []>} : vector<14x64xf32>, vector<64x64xf32>, vector<14x64xf32> -> vector<14x64xf32>
    %106 = arith.addf %99, %105 : vector<14x64xf32>
    %c0_114 = arith.constant 0 : index
    %c0_115 = arith.constant 0 : index
    %107 = vector.load %arg15[%c0_114, %c0_115] : memref<1x64xf32, #tpu.memory_space<vmem>>, vector<1x64xf32>
    %108 = vector.broadcast %107 : vector<1x64xf32> to vector<14x64xf32>
    %109 = arith.addf %106, %108 : vector<14x64xf32>
    %cst_116 = arith.constant 0.000000e+00 : f32
    %110 = vector.broadcast %cst_116 : f32 to vector<14x64xf32>
    %111 = arith.maximumf %109, %110 : vector<14x64xf32>
    %112 = arith.addf %61, %111 : vector<14x64xf32>
    %c0_117 = arith.constant 0 : index
    %c0_118 = arith.constant 0 : index
    %c0_119 = arith.constant 0 : index
    %113 = vector.load %arg11[%c0_117, %c0_118, %c0_119] : memref<3x14x14xf32, #tpu.memory_space<vmem>>, vector<1x14x14xf32>
    %114 = vector.shape_cast %113 : vector<1x14x14xf32> to vector<14x14xf32>
    %cst_120 = arith.constant dense<0.000000e+00> : vector<14x64xf32>
    %115 = tpu.matmul %114, %112, %cst_120 {dimension_numbers = #tpu.dot_dimension_numbers<[1], [0], [0], [1], [0, 0, 1, 1], [], []>} : vector<14x14xf32>, vector<14x64xf32>, vector<14x64xf32> -> vector<14x64xf32>
    %c0_121 = arith.constant 0 : index
    %c0_122 = arith.constant 0 : index
    %c0_123 = arith.constant 0 : index
    %116 = vector.load %arg16[%c0_121, %c0_122, %c0_123] : memref<3x64x128xf32, #tpu.memory_space<vmem>>, vector<1x64x128xf32>
    %117 = vector.shape_cast %116 : vector<1x64x128xf32> to vector<64x128xf32>
    %cst_124 = arith.constant dense<0.000000e+00> : vector<14x128xf32>
    %118 = tpu.matmul %115, %117, %cst_124 {dimension_numbers = #tpu.dot_dimension_numbers<[1], [0], [0], [1], [0, 0, 1, 1], [], []>} : vector<14x64xf32>, vector<64x128xf32>, vector<14x128xf32> -> vector<14x128xf32>
    %c1_125 = arith.constant 1 : index
    %c0_126 = arith.constant 0 : index
    %c0_127 = arith.constant 0 : index
    %119 = vector.load %arg11[%c1_125, %c0_126, %c0_127] : memref<3x14x14xf32, #tpu.memory_space<vmem>>, vector<1x14x14xf32>
    %120 = vector.shape_cast %119 : vector<1x14x14xf32> to vector<14x14xf32>
    %cst_128 = arith.constant dense<0.000000e+00> : vector<14x64xf32>
    %121 = tpu.matmul %120, %112, %cst_128 {dimension_numbers = #tpu.dot_dimension_numbers<[1], [0], [0], [1], [0, 0, 1, 1], [], []>} : vector<14x14xf32>, vector<14x64xf32>, vector<14x64xf32> -> vector<14x64xf32>
    %c1_129 = arith.constant 1 : index
    %c0_130 = arith.constant 0 : index
    %c0_131 = arith.constant 0 : index
    %122 = vector.load %arg16[%c1_129, %c0_130, %c0_131] : memref<3x64x128xf32, #tpu.memory_space<vmem>>, vector<1x64x128xf32>
    %123 = vector.shape_cast %122 : vector<1x64x128xf32> to vector<64x128xf32>
    %cst_132 = arith.constant dense<0.000000e+00> : vector<14x128xf32>
    %124 = tpu.matmul %121, %123, %cst_132 {dimension_numbers = #tpu.dot_dimension_numbers<[1], [0], [0], [1], [0, 0, 1, 1], [], []>} : vector<14x64xf32>, vector<64x128xf32>, vector<14x128xf32> -> vector<14x128xf32>
    %125 = arith.addf %118, %124 : vector<14x128xf32>
    %c2_133 = arith.constant 2 : index
    %c0_134 = arith.constant 0 : index
    %c0_135 = arith.constant 0 : index
    %126 = vector.load %arg11[%c2_133, %c0_134, %c0_135] : memref<3x14x14xf32, #tpu.memory_space<vmem>>, vector<1x14x14xf32>
    %127 = vector.shape_cast %126 : vector<1x14x14xf32> to vector<14x14xf32>
    %cst_136 = arith.constant dense<0.000000e+00> : vector<14x64xf32>
    %128 = tpu.matmul %127, %112, %cst_136 {dimension_numbers = #tpu.dot_dimension_numbers<[1], [0], [0], [1], [0, 0, 1, 1], [], []>} : vector<14x14xf32>, vector<14x64xf32>, vector<14x64xf32> -> vector<14x64xf32>
    %c2_137 = arith.constant 2 : index
    %c0_138 = arith.constant 0 : index
    %c0_139 = arith.constant 0 : index
    %129 = vector.load %arg16[%c2_137, %c0_138, %c0_139] : memref<3x64x128xf32, #tpu.memory_space<vmem>>, vector<1x64x128xf32>
    %130 = vector.shape_cast %129 : vector<1x64x128xf32> to vector<64x128xf32>
    %cst_140 = arith.constant dense<0.000000e+00> : vector<14x128xf32>
    %131 = tpu.matmul %128, %130, %cst_140 {dimension_numbers = #tpu.dot_dimension_numbers<[1], [0], [0], [1], [0, 0, 1, 1], [], []>} : vector<14x64xf32>, vector<64x128xf32>, vector<14x128xf32> -> vector<14x128xf32>
    %132 = arith.addf %125, %131 : vector<14x128xf32>
    %c0_141 = arith.constant 0 : index
    %c0_142 = arith.constant 0 : index
    %133 = vector.load %arg17[%c0_141, %c0_142] : memref<1x128xf32, #tpu.memory_space<vmem>>, vector<1x128xf32>
    %134 = vector.broadcast %133 : vector<1x128xf32> to vector<14x128xf32>
    %135 = arith.addf %132, %134 : vector<14x128xf32>
    %cst_143 = arith.constant 0.000000e+00 : f32
    %136 = vector.broadcast %cst_143 : f32 to vector<14x128xf32>
    %137 = arith.maximumf %135, %136 : vector<14x128xf32>
    %c0_144 = arith.constant 0 : index
    %c0_145 = arith.constant 0 : index
    %c0_146 = arith.constant 0 : index
    %138 = vector.load %arg11[%c0_144, %c0_145, %c0_146] : memref<3x14x14xf32, #tpu.memory_space<vmem>>, vector<1x14x14xf32>
    %139 = vector.shape_cast %138 : vector<1x14x14xf32> to vector<14x14xf32>
    %cst_147 = arith.constant dense<0.000000e+00> : vector<14x128xf32>
    %140 = tpu.matmul %139, %137, %cst_147 {dimension_numbers = #tpu.dot_dimension_numbers<[1], [0], [0], [1], [0, 0, 1, 1], [], []>} : vector<14x14xf32>, vector<14x128xf32>, vector<14x128xf32> -> vector<14x128xf32>
    %c0_148 = arith.constant 0 : index
    %c0_149 = arith.constant 0 : index
    %c0_150 = arith.constant 0 : index
    %141 = vector.load %arg18[%c0_148, %c0_149, %c0_150] : memref<3x128x128xf32, #tpu.memory_space<vmem>>, vector<1x128x128xf32>
    %142 = vector.shape_cast %141 : vector<1x128x128xf32> to vector<128x128xf32>
    %cst_151 = arith.constant dense<0.000000e+00> : vector<14x128xf32>
    %143 = tpu.matmul %140, %142, %cst_151 {dimension_numbers = #tpu.dot_dimension_numbers<[1], [0], [0], [1], [0, 0, 1, 1], [], []>} : vector<14x128xf32>, vector<128x128xf32>, vector<14x128xf32> -> vector<14x128xf32>
    %c1_152 = arith.constant 1 : index
    %c0_153 = arith.constant 0 : index
    %c0_154 = arith.constant 0 : index
    %144 = vector.load %arg11[%c1_152, %c0_153, %c0_154] : memref<3x14x14xf32, #tpu.memory_space<vmem>>, vector<1x14x14xf32>
    %145 = vector.shape_cast %144 : vector<1x14x14xf32> to vector<14x14xf32>
    %cst_155 = arith.constant dense<0.000000e+00> : vector<14x128xf32>
    %146 = tpu.matmul %145, %137, %cst_155 {dimension_numbers = #tpu.dot_dimension_numbers<[1], [0], [0], [1], [0, 0, 1, 1], [], []>} : vector<14x14xf32>, vector<14x128xf32>, vector<14x128xf32> -> vector<14x128xf32>
    %c1_156 = arith.constant 1 : index
    %c0_157 = arith.constant 0 : index
    %c0_158 = arith.constant 0 : index
    %147 = vector.load %arg18[%c1_156, %c0_157, %c0_158] : memref<3x128x128xf32, #tpu.memory_space<vmem>>, vector<1x128x128xf32>
    %148 = vector.shape_cast %147 : vector<1x128x128xf32> to vector<128x128xf32>
    %cst_159 = arith.constant dense<0.000000e+00> : vector<14x128xf32>
    %149 = tpu.matmul %146, %148, %cst_159 {dimension_numbers = #tpu.dot_dimension_numbers<[1], [0], [0], [1], [0, 0, 1, 1], [], []>} : vector<14x128xf32>, vector<128x128xf32>, vector<14x128xf32> -> vector<14x128xf32>
    %150 = arith.addf %143, %149 : vector<14x128xf32>
    %c2_160 = arith.constant 2 : index
    %c0_161 = arith.constant 0 : index
    %c0_162 = arith.constant 0 : index
    %151 = vector.load %arg11[%c2_160, %c0_161, %c0_162] : memref<3x14x14xf32, #tpu.memory_space<vmem>>, vector<1x14x14xf32>
    %152 = vector.shape_cast %151 : vector<1x14x14xf32> to vector<14x14xf32>
    %cst_163 = arith.constant dense<0.000000e+00> : vector<14x128xf32>
    %153 = tpu.matmul %152, %137, %cst_163 {dimension_numbers = #tpu.dot_dimension_numbers<[1], [0], [0], [1], [0, 0, 1, 1], [], []>} : vector<14x14xf32>, vector<14x128xf32>, vector<14x128xf32> -> vector<14x128xf32>
    %c2_164 = arith.constant 2 : index
    %c0_165 = arith.constant 0 : index
    %c0_166 = arith.constant 0 : index
    %154 = vector.load %arg18[%c2_164, %c0_165, %c0_166] : memref<3x128x128xf32, #tpu.memory_space<vmem>>, vector<1x128x128xf32>
    %155 = vector.shape_cast %154 : vector<1x128x128xf32> to vector<128x128xf32>
    %cst_167 = arith.constant dense<0.000000e+00> : vector<14x128xf32>
    %156 = tpu.matmul %153, %155, %cst_167 {dimension_numbers = #tpu.dot_dimension_numbers<[1], [0], [0], [1], [0, 0, 1, 1], [], []>} : vector<14x128xf32>, vector<128x128xf32>, vector<14x128xf32> -> vector<14x128xf32>
    %157 = arith.addf %150, %156 : vector<14x128xf32>
    %c0_168 = arith.constant 0 : index
    %c0_169 = arith.constant 0 : index
    %158 = vector.load %arg19[%c0_168, %c0_169] : memref<1x128xf32, #tpu.memory_space<vmem>>, vector<1x128xf32>
    %159 = vector.broadcast %158 : vector<1x128xf32> to vector<14x128xf32>
    %160 = arith.addf %157, %159 : vector<14x128xf32>
    %cst_170 = arith.constant 0.000000e+00 : f32
    %161 = vector.broadcast %cst_170 : f32 to vector<14x128xf32>
    %162 = arith.maximumf %160, %161 : vector<14x128xf32>
    %c0_171 = arith.constant 0 : index
    %c0_172 = arith.constant 0 : index
    %163 = vector.load %arg20[%c0_171, %c0_172] : memref<2x14xf32, #tpu.memory_space<vmem>>, vector<2x14xf32>
    %cst_173 = arith.constant dense<0.000000e+00> : vector<2x128xf32>
    %164 = tpu.matmul %163, %162, %cst_173 {dimension_numbers = #tpu.dot_dimension_numbers<[1], [0], [0], [1], [0, 0, 1, 1], [], []>} : vector<2x14xf32>, vector<14x128xf32>, vector<2x128xf32> -> vector<2x128xf32>
    %c0_174 = arith.constant 0 : index
    %c0_175 = arith.constant 0 : index
    %165 = vector.load %arg21[%c0_174, %c0_175] : memref<128x20xf32, #tpu.memory_space<vmem>>, vector<128x20xf32>
    %cst_176 = arith.constant dense<0.000000e+00> : vector<2x20xf32>
    %166 = tpu.matmul %164, %165, %cst_176 {dimension_numbers = #tpu.dot_dimension_numbers<[1], [0], [0], [1], [0, 0, 1, 1], [], []>} : vector<2x128xf32>, vector<128x20xf32>, vector<2x20xf32> -> vector<2x20xf32>
    %c0_177 = arith.constant 0 : index
    %c0_178 = arith.constant 0 : index
    %167 = vector.load %arg22[%c0_177, %c0_178] : memref<1x20xf32, #tpu.memory_space<vmem>>, vector<1x20xf32>
    %168 = vector.broadcast %167 : vector<1x20xf32> to vector<2x20xf32>
    %169 = arith.addf %166, %168 : vector<2x20xf32>
    %c0_179 = arith.constant 0 : index
    %c0_180 = arith.constant 0 : index
    %170 = vector.load %arg23[%c0_179, %c0_180] : memref<2x20xf32, #tpu.memory_space<vmem>>, vector<2x20xf32>
    tpu.vector_store %arg23[%c0_179, %c0_180], %169 {strides = array<i32>} : memref<2x20xf32, #tpu.memory_space<vmem>>, vector<2x20xf32>,
    return
  }
  func.func @transform_0(%arg0: i32) -> (i32, i32) {
    %c0_i32 = arith.constant 0 : i32
    %c0_i32_0 = arith.constant 0 : i32
    %c0_i32_1 = arith.constant 0 : i32
    return %c0_i32, %c0_i32_0 : i32, i32
  }
  func.func @transform_1(%arg0: i32) -> (i32, i32, i32) {
    %c0_i32 = arith.constant 0 : i32
    %c0_i32_0 = arith.constant 0 : i32
    %c0_i32_1 = arith.constant 0 : i32
    %c0_i32_2 = arith.constant 0 : i32
    return %c0_i32, %c0_i32_0, %c0_i32_1 : i32, i32, i32
  }
  func.func @transform_2(%arg0: i32) -> (i32, i32, i32) {
    %c0_i32 = arith.constant 0 : i32
    %c0_i32_0 = arith.constant 0 : i32
    %c0_i32_1 = arith.constant 0 : i32
    %c0_i32_2 = arith.constant 0 : i32
    return %c0_i32, %c0_i32_0, %c0_i32_1 : i32, i32, i32
  }
  func.func @transform_3(%arg0: i32) -> (i32, i32) {
    %c0_i32 = arith.constant 0 : i32
    %c0_i32_0 = arith.constant 0 : i32
    %c0_i32_1 = arith.constant 0 : i32
    return %c0_i32, %c0_i32_0 : i32, i32
  }
  func.func @transform_4(%arg0: i32) -> (i32, i32, i32) {
    %c0_i32 = arith.constant 0 : i32
    %c0_i32_0 = arith.constant 0 : i32
    %c0_i32_1 = arith.constant 0 : i32
    %c0_i32_2 = arith.constant 0 : i32
    return %c0_i32, %c0_i32_0, %c0_i32_1 : i32, i32, i32
  }
  func.func @transform_5(%arg0: i32) -> (i32, i32, i32) {
    %c0_i32 = arith.constant 0 : i32
    %c0_i32_0 = arith.constant 0 : i32
    %c0_i32_1 = arith.constant 0 : i32
    %c0_i32_2 = arith.constant 0 : i32
    return %c0_i32, %c0_i32_0, %c0_i32_1 : i32, i32, i32
  }
  func.func @transform_6(%arg0: i32) -> (i32, i32) {
    %c0_i32 = arith.constant 0 : i32
    %c0_i32_0 = arith.constant 0 : i32
    %c0_i32_1 = arith.constant 0 : i32
    return %c0_i32, %c0_i32_0 : i32, i32
  }
  func.func @transform_7(%arg0: i32) -> (i32, i32, i32) {
    %c0_i32 = arith.constant 0 : i32
    %c0_i32_0 = arith.constant 0 : i32
    %c0_i32_1 = arith.constant 0 : i32
    %c0_i32_2 = arith.constant 0 : i32
    return %c0_i32, %c0_i32_0, %c0_i32_1 : i32, i32, i32
  }
  func.func @transform_8(%arg0: i32) -> (i32, i32, i32) {
    %c0_i32 = arith.constant 0 : i32
    %c0_i32_0 = arith.constant 0 : i32
    %c0_i32_1 = arith.constant 0 : i32
    %c0_i32_2 = arith.constant 0 : i32
    return %c0_i32, %c0_i32_0, %c0_i32_1 : i32, i32, i32
  }
  func.func @transform_9(%arg0: i32) -> (i32, i32) {
    %c0_i32 = arith.constant 0 : i32
    %c0_i32_0 = arith.constant 0 : i32
    %c0_i32_1 = arith.constant 0 : i32
    return %c0_i32, %c0_i32_0 : i32, i32
  }
  func.func @transform_10(%arg0: i32) -> (i32, i32, i32) {
    %c0_i32 = arith.constant 0 : i32
    %c0_i32_0 = arith.constant 0 : i32
    %c0_i32_1 = arith.constant 0 : i32
    %c0_i32_2 = arith.constant 0 : i32
    return %c0_i32, %c0_i32_0, %c0_i32_1 : i32, i32, i32
  }
  func.func @transform_11(%arg0: i32) -> (i32, i32, i32) {
    %c0_i32 = arith.constant 0 : i32
    %c0_i32_0 = arith.constant 0 : i32
    %c0_i32_1 = arith.constant 0 : i32
    %c0_i32_2 = arith.constant 0 : i32
    return %c0_i32, %c0_i32_0, %c0_i32_1 : i32, i32, i32
  }
  func.func @transform_12(%arg0: i32) -> (i32, i32) {
    %c0_i32 = arith.constant 0 : i32
    %c0_i32_0 = arith.constant 0 : i32
    %c0_i32_1 = arith.constant 0 : i32
    return %c0_i32, %c0_i32_0 : i32, i32
  }
  func.func @transform_13(%arg0: i32) -> (i32, i32, i32) {
    %c0_i32 = arith.constant 0 : i32
    %c0_i32_0 = arith.constant 0 : i32
    %c0_i32_1 = arith.constant 0 : i32
    %c0_i32_2 = arith.constant 0 : i32
    return %c0_i32, %c0_i32_0, %c0_i32_1 : i32, i32, i32
  }
  func.func @transform_14(%arg0: i32) -> (i32, i32) {
    %c0_i32 = arith.constant 0 : i32
    %c0_i32_0 = arith.constant 0 : i32
    %c0_i32_1 = arith.constant 0 : i32
    return %c0_i32, %c0_i32_0 : i32, i32
  }
  func.func @transform_15(%arg0: i32) -> (i32, i32, i32) {
    %c0_i32 = arith.constant 0 : i32
    %c0_i32_0 = arith.constant 0 : i32
    %c0_i32_1 = arith.constant 0 : i32
    %c0_i32_2 = arith.constant 0 : i32
    return %c0_i32, %c0_i32_0, %c0_i32_1 : i32, i32, i32
  }
  func.func @transform_16(%arg0: i32) -> (i32, i32) {
    %c0_i32 = arith.constant 0 : i32
    %c0_i32_0 = arith.constant 0 : i32
    %c0_i32_1 = arith.constant 0 : i32
    return %c0_i32, %c0_i32_0 : i32, i32
  }
  func.func @transform_17(%arg0: i32) -> (i32, i32, i32) {
    %c0_i32 = arith.constant 0 : i32
    %c0_i32_0 = arith.constant 0 : i32
    %c0_i32_1 = arith.constant 0 : i32
    %c0_i32_2 = arith.constant 0 : i32
    return %c0_i32, %c0_i32_0, %c0_i32_1 : i32, i32, i32
  }
  func.func @transform_18(%arg0: i32) -> (i32, i32) {
    %c0_i32 = arith.constant 0 : i32
    %c0_i32_0 = arith.constant 0 : i32
    %c0_i32_1 = arith.constant 0 : i32
    return %c0_i32, %c0_i32_0 : i32, i32
  }
  func.func @transform_19(%arg0: i32) -> (i32, i32) {
    %c0_i32 = arith.constant 0 : i32
    %c0_i32_0 = arith.constant 0 : i32
    %c0_i32_1 = arith.constant 0 : i32
    return %c0_i32, %c0_i32_0 : i32, i32
  }
  func.func @transform_20(%arg0: i32) -> (i32, i32) {
    %c0_i32 = arith.constant 0 : i32
    %c0_i32_0 = arith.constant 0 : i32
    %c0_i32_1 = arith.constant 0 : i32
    return %c0_i32, %c0_i32_0 : i32, i32
  }
  func.func @transform_21(%arg0: i32) -> (i32, i32) {
    %c0_i32 = arith.constant 0 : i32
    %c0_i32_0 = arith.constant 0 : i32
    %c0_i32_1 = arith.constant 0 : i32
    return %c0_i32, %c0_i32_0 : i32, i32
  }
  func.func @transform_22(%arg0: i32) -> (i32, i32) {
    %c0_i32 = arith.constant 0 : i32
    %c0_i32_0 = arith.constant 0 : i32
    %c0_i32_1 = arith.constant 0 : i32
    return %c0_i32, %c0_i32_0 : i32, i32
  }
}

</mosaic_0001>

<llo_original>
// kernel: t3cnn_forward.1
$region0: #{t3cnn_forward.1}
  #allocation0 [shape = 'u32[]', space=smem, size = 0x4, offset = 0x4, fixed_abs, tag = 'smem constant byte address 0x4 - core index']
  #allocation1 [shape = 'u32[72,128]{1,0:T(1,128)}', space=vmem, size = 0x9000, scoped, tag = 'internal scratch']
  %s0 = inlined_call_operand.hbm [shape: f32[32,16], index: 0, kind: input, shape index: {}]
  %s1 = inlined_call_operand.hbm [shape: f32[3,28,32], index: 1, kind: input, shape index: {}]
  %s2 = inlined_call_operand.hbm [shape: f32[3,16,48], index: 2, kind: input, shape index: {}]
  %s3 = inlined_call_operand.hbm [shape: f32[1,48], index: 3, kind: input, shape index: {}]
  %s4 = inlined_call_operand.hbm [shape: f32[3,24,28], index: 4, kind: input, shape index: {}]
  %s5 = inlined_call_operand.hbm [shape: f32[3,48,32], index: 5, kind: input, shape index: {}]
  %s6 = inlined_call_operand.hbm [shape: f32[1,32], index: 6, kind: input, shape index: {}]
  %s7 = inlined_call_operand.hbm [shape: f32[1,14,24], index: 7, kind: input, shape index: {}]
  %s8 = inlined_call_operand.hbm [shape: f32[1,32,64], index: 8, kind: input, shape index: {}]
  %s9 = inlined_call_operand.vmem [shape: f32[1,64], index: 9, kind: input, shape index: {}]
  %s10 = inlined_call_operand.hbm [shape: f32[3,14,14], index: 10, kind: input, shape index: {}]
  %s11 = inlined_call_operand.hbm [shape: f32[3,64,64], index: 11, kind: input, shape index: {}]
  %s12 = inlined_call_operand.vmem [shape: f32[1,64], index: 12, kind: input, shape index: {}]
  %s13 = inlined_call_operand.hbm [shape: f32[3,64,64], index: 13, kind: input, shape index: {}]
  %s14 = inlined_call_operand.vmem [shape: f32[1,64], index: 14, kind: input, shape index: {}]
  %s15 = inlined_call_operand.hbm [shape: f32[3,64,128], index: 15, kind: input, shape index: {}]
  %s16 = inlined_call_operand.vmem [shape: f32[1,128], index: 16, kind: input, shape index: {}]
  %s17 = inlined_call_operand.hbm [shape: f32[3,128,128], index: 17, kind: input, shape index: {}]
  %s18 = inlined_call_operand.vmem [shape: f32[1,128], index: 18, kind: input, shape index: {}]
  %s19 = inlined_call_operand.vmem [shape: f32[2,14], index: 19, kind: input, shape index: {}]
  %s20 = inlined_call_operand.hbm [shape: f32[128,20], index: 20, kind: input, shape index: {}]
  %s21 = inlined_call_operand.vmem [shape: f32[1,20], index: 21, kind: input, shape index: {}]
  %s22 = inlined_call_operand.hbm [shape: f32[2,20], index: 22, kind: output, shape index: {}]
  %s23 = sld [smem:[#allocation0]]
  $region158: #{t3cnn_forward.1} parent=0
    _
  %s25 = ssub.s32 1, %s23
  %s26 = scalar_select 0, %s25, %s23
  $region1: #{t3cnn_forward.1} parent=0
    #allocation2 [shape = 'u8[16384]{0}', space=vmem, size = 0x4000, scoped, tag = 'input window, operand 0, single buffered']
    #allocation3 [shape = 's32[1]{0}', space=sflag, size = 0x4, scoped, tag = 'scoped memory for t3cnn_forward.1']
    #allocation4 [shape = 's32[1]{0}', space=sflag, size = 0x4, scoped, tag = 'scoped memory for t3cnn_forward.1']
    #allocation5 [shape = 'u8[49152]{0}', space=vmem, size = 0xc000, scoped, tag = 'input window, operand 1, single buffered']
    #allocation6 [shape = 's32[1]{0}', space=sflag, size = 0x4, scoped, tag = 'scoped memory for t3cnn_forward.1']
    #allocation7 [shape = 'u8[24576]{0}', space=vmem, size = 0x6000, scoped, tag = 'input window, operand 2, single buffered']
    #allocation8 [shape = 'u8[512]{0}', space=vmem, size = 0x400, scoped, tag = 'input window, operand 3, single buffered']
    #allocation9 [shape = 's32[1]{0}', space=sflag, size = 0x4, scoped, tag = 'scoped memory for t3cnn_forward.1']
    #allocation10 [shape = 'u8[36864]{0}', space=vmem, size = 0x9000, scoped, tag = 'input window, operand 4, single buffered']
    #allocation11 [shape = 'u8[73728]{0}', space=vmem, size = 0x12000, scoped, tag = 'input window, operand 5, single buffered']
    #allocation12 [shape = 's32[1]{0}', space=sflag, size = 0x4, scoped, tag = 'scoped memory for t3cnn_forward.1']
    #allocation13 [shape = 'u8[512]{0}', space=vmem, size = 0x400, scoped, tag = 'input window, operand 6, single buffered']
    #allocation14 [shape = 'u8[8192]{0}', space=vmem, size = 0x2000, scoped, tag = 'input window, operand 7, single buffered']
    #allocation15 [shape = 's32[1]{0}', space=sflag, size = 0x4, scoped, tag = 'scoped memory for t3cnn_forward.1']
    #allocation16 [shape = 'u8[16384]{0}', space=vmem, size = 0x4000, scoped, tag = 'input window, operand 8, single buffered']
    #allocation17 [shape = 'u8[24576]{0}', space=vmem, size = 0x6000, scoped, tag = 'input window, operand 10, single buffered']
    #allocation18 [shape = 's32[1]{0}', space=sflag, size = 0x4, scoped, tag = 'scoped memory for t3cnn_forward.1']
    #allocation19 [shape = 'u8[98304]{0}', space=vmem, size = 0x18000, scoped, tag = 'input window, operand 11, single buffered']
    #allocation20 [shape = 'u8[98304]{0}', space=vmem, size = 0x18000, scoped, tag = 'input window, operand 13, single buffered']
    #allocation21 [shape = 's32[1]{0}', space=sflag, size = 0x4, scoped, tag = 'scoped memory for t3cnn_forward.1']
    #allocation22 [shape = 'u8[98304]{0}', space=vmem, size = 0x18000, scoped, tag = 'input window, operand 15, single buffered']
    #allocation23 [shape = 'u8[196608]{0}', space=vmem, size = 0x30000, scoped, tag = 'input window, operand 17, single buffered']
    #allocation24 [shape = 's32[1]{0}', space=sflag, size = 0x4, scoped, tag = 'scoped memory for t3cnn_forward.1']
    #allocation25 [shape = 'u8[65536]{0}', space=vmem, size = 0x10000, scoped, tag = 'input window, operand 20, single buffered']
    #allocation26 [shape = 'u8[1024]{0}', space=vmem, size = 0x400, scoped, tag = 'output window, operand 0, single buffered']
    %27 = vsyncpa [#allocation3], 0
    %28 = vsyncpa [#allocation6], 0
    %29 = vsyncpa [#allocation9], 0
    %30 = vsyncpa [#allocation12], 0
    %31 = vsyncpa [#allocation15], 0
    %32 = vsyncpa [#allocation18], 0
    %33 = vsyncpa [#allocation21], 0
    %34 = vsyncpa [#allocation24], 0
    %35 = vsyncpa [#allocation4], 0
    // Predicated region
    $region2: #{t3cnn_forward.1} parent=1 // pred_check
      _
    $region3: #{t3cnn_forward.1} parent=1 // pred_check_branch
      %37 = sbr.rel (0) target = $region5
    $region4: #{t3cnn_forward.1} parent=1 // pred_region
      %39 = vsyncadd [#allocation3], 0
      %s40 = sshll.u32 %s0, 4
      %s41 = int_to_ptr.hbm [resolvable:$true] %s40
      %s42 = sshll.u32 [#allocation2], 4
      %s43 = int_to_ptr.vmem [resolvable:$true] %s42
      %48 = dma.hbm_to_vmem [thread:$0]  %s41, 512, %s43, [#allocation3], 128, 128, 8
    $region5: #{t3cnn_forward.1} parent=1 // pred_fallthru
      _
    // Predicated region
    $region6: #{t3cnn_forward.1} parent=1 // pred_check
      _
    $region7: #{t3cnn_forward.1} parent=1 // pred_check_branch
      %50 = sbr.rel (0) target = $region9
    $region8: #{t3cnn_forward.1} parent=1 // pred_region
      %52 = vsyncadd [#allocation6], 0
      %s53 = sshll.u32 %s1, 4
      %s54 = int_to_ptr.hbm [resolvable:$true] %s53
      %s55 = sshll.u32 [#allocation5], 4
      %s56 = int_to_ptr.vmem [resolvable:$true] %s55
      %61 = dma.hbm_to_vmem [thread:$0]  %s54, 1536, %s56, [#allocation6], 128, 128, 8
    $region9: #{t3cnn_forward.1} parent=1 // pred_fallthru
      _
    // Predicated region
    $region10: #{t3cnn_forward.1} parent=1 // pred_check
      _
    $region11: #{t3cnn_forward.1} parent=1 // pred_check_branch
      %63 = sbr.rel (0) target = $region13
    $region12: #{t3cnn_forward.1} parent=1 // pred_region
      %65 = vsyncadd [#allocation6], 0
      %s66 = sshll.u32 %s2, 4
      %s67 = int_to_ptr.hbm [resolvable:$true] %s66
      %s68 = sshll.u32 [#allocation7], 4
      %s69 = int_to_ptr.vmem [resolvable:$true] %s68
      %74 = dma.hbm_to_vmem [thread:$0]  %s67, 768, %s69, [#allocation6], 128, 128, 8
    $region13: #{t3cnn_forward.1} parent=1 // pred_fallthru
      _
    // Predicated region
    $region14: #{t3cnn_forward.1} parent=1 // pred_check
      _
    $region15: #{t3cnn_forward.1} parent=1 // pred_check_branch
      %76 = sbr.rel (0) target = $region17
    $region16: #{t3cnn_forward.1} parent=1 // pred_region
      %78 = vsyncadd [#allocation9], 0
      %s80 = sshll.u32 %s3, 4
      %s81 = int_to_ptr.hbm [resolvable:$true] %s80
      %s82 = sshll.u32 [#allocation8], 4
      %s83 = int_to_ptr.vmem [resolvable:$true] %s82
      %85 = dma.hbm_to_vmem [thread:$0]  %s81, 16, %s83, [#allocation9]
    $region17: #{t3cnn_forward.1} parent=1 // pred_fallthru
      _
    // Predicated region
    $region18: #{t3cnn_forward.1} parent=1 // pred_check
      _
    $region19: #{t3cnn_forward.1} parent=1 // pred_check_branch
      %87 = sbr.rel (0) target = $region21
    $region20: #{t3cnn_forward.1} parent=1 // pred_region
      %89 = vsyncadd [#allocation9], 0
      %s90 = sshll.u32 %s4, 4
      %s91 = int_to_ptr.hbm [resolvable:$true] %s90
      %s92 = sshll.u32 [#allocation10], 4
      %s93 = int_to_ptr.vmem [resolvable:$true] %s92
      %98 = dma.hbm_to_vmem [thread:$0]  %s91, 1152, %s93, [#allocation9], 128, 128, 8
    $region21: #{t3cnn_forward.1} parent=1 // pred_fallthru
      _
    // Predicated region
    $region22: #{t3cnn_forward.1} parent=1 // pred_check
      _
    $region23: #{t3cnn_forward.1} parent=1 // pred_check_branch
      %100 = sbr.rel (0) target = $region25
    $region24: #{t3cnn_forward.1} parent=1 // pred_region
      %102 = vsyncadd [#allocation12], 0
      %s103 = sshll.u32 %s5, 4
      %s104 = int_to_ptr.hbm [resolvable:$true] %s103
      %s105 = sshll.u32 [#allocation11], 4
      %s106 = int_to_ptr.vmem [resolvable:$true] %s105
      %111 = dma.hbm_to_vmem [thread:$0]  %s104, 2304, %s106, [#allocation12], 128, 128, 8
    $region25: #{t3cnn_forward.1} parent=1 // pred_fallthru
      _
    // Predicated region
    $region26: #{t3cnn_forward.1} parent=1 // pred_check
      _
    $region27: #{t3cnn_forward.1} parent=1 // pred_check_branch
      %113 = sbr.rel (0) target = $region29
    $region28: #{t3cnn_forward.1} parent=1 // pred_region
      %115 = vsyncadd [#allocation12], 0
      %s117 = sshll.u32 %s6, 4
      %s118 = int_to_ptr.hbm [resolvable:$true] %s117
      %s119 = sshll.u32 [#allocation13], 4
      %s120 = int_to_ptr.vmem [resolvable:$true] %s119
      %122 = dma.hbm_to_vmem [thread:$0]  %s118, 16, %s120, [#allocation12]
    $region29: #{t3cnn_forward.1} parent=1 // pred_fallthru
      _
    // Predicated region
    $region30: #{t3cnn_forward.1} parent=1 // pred_check
      _
    $region31: #{t3cnn_forward.1} parent=1 // pred_check_branch
      %124 = sbr.rel (0) target = $region33
    $region32: #{t3cnn_forward.1} parent=1 // pred_region
      %126 = vsyncadd [#allocation15], 0
      %s127 = sshll.u32 %s7, 4
      %s128 = int_to_ptr.hbm [resolvable:$true] %s127
      %s129 = sshll.u32 [#allocation14], 4
      %s130 = int_to_ptr.vmem [resolvable:$true] %s129
      %135 = dma.hbm_to_vmem [thread:$0]  %s128, 256, %s130, [#allocation15], 128, 128, 8
    $region33: #{t3cnn_forward.1} parent=1 // pred_fallthru
      _
    // Predicated region
    $region34: #{t3cnn_forward.1} parent=1 // pred_check
      _
    $region35: #{t3cnn_forward.1} parent=1 // pred_check_branch
      %137 = sbr.rel (0) target = $region37
    $region36: #{t3cnn_forward.1} parent=1 // pred_region
      %139 = vsyncadd [#allocation15], 0
      %s140 = sshll.u32 %s8, 4
      %s141 = int_to_ptr.hbm [resolvable:$true] %s140
      %s142 = sshll.u32 [#allocation16], 4
      %s143 = int_to_ptr.vmem [resolvable:$true] %s142
      %148 = dma.hbm_to_vmem [thread:$0]  %s141, 512, %s143, [#allocation15], 128, 128, 8
    $region37: #{t3cnn_forward.1} parent=1 // pred_fallthru
      _
    // Predicated region
    $region38: #{t3cnn_forward.1} parent=1 // pred_check
      _
    $region39: #{t3cnn_forward.1} parent=1 // pred_check_branch
      %150 = sbr.rel (0) target = $region41
    $region40: #{t3cnn_forward.1} parent=1 // pred_region
      _
    $region41: #{t3cnn_forward.1} parent=1 // pred_fallthru
      _
    // Predicated region
    $region42: #{t3cnn_forward.1} parent=1 // pred_check
      _
    $region43: #{t3cnn_forward.1} parent=1 // pred_check_branch
      %152 = sbr.rel (0) target = $region45
    $region44: #{t3cnn_forward.1} parent=1 // pred_region
      %154 = vsyncadd [#allocation18], 0
      %s155 = sshll.u32 %s10, 4
      %s156 = int_to_ptr.hbm [resolvable:$true] %s155
      %s157 = sshll.u32 [#allocation17], 4
      %s158 = int_to_ptr.vmem [resolvable:$true] %s157
      %163 = dma.hbm_to_vmem [thread:$0]  %s156, 768, %s158, [#allocation18], 128, 128, 8
    $region45: #{t3cnn_forward.1} parent=1 // pred_fallthru
      _
    // Predicated region
    $region46: #{t3cnn_forward.1} parent=1 // pred_check
      _
    $region47: #{t3cnn_forward.1} parent=1 // pred_check_branch
      %165 = sbr.rel (0) target = $region49
    $region48: #{t3cnn_forward.1} parent=1 // pred_region
      %167 = vsyncadd [#allocation18], 0
      %s168 = sshll.u32 %s11, 4
      %s169 = int_to_ptr.hbm [resolvable:$true] %s168
      %s170 = sshll.u32 [#allocation19], 4
      %s171 = int_to_ptr.vmem [resolvable:$true] %s170
      %176 = dma.hbm_to_vmem [thread:$0]  %s169, 3072, %s171, [#allocation18], 128, 128, 8
    $region49: #{t3cnn_forward.1} parent=1 // pred_fallthru
      _
    // Predicated region
    $region50: #{t3cnn_forward.1} parent=1 // pred_check
      _
    $region51: #{t3cnn_forward.1} parent=1 // pred_check_branch
      %178 = sbr.rel (0) target = $region53
    $region52: #{t3cnn_forward.1} parent=1 // pred_region
      _
    $region53: #{t3cnn_forward.1} parent=1 // pred_fallthru
      _
    // Predicated region
    $region54: #{t3cnn_forward.1} parent=1 // pred_check
      _
    $region55: #{t3cnn_forward.1} parent=1 // pred_check_branch
      %180 = sbr.rel (0) target = $region57
    $region56: #{t3cnn_forward.1} parent=1 // pred_region
      %182 = vsyncadd [#allocation21], 0
      %s183 = sshll.u32 %s13, 4
      %s184 = int_to_ptr.hbm [resolvable:$true] %s183
      %s185 = sshll.u32 [#allocation20], 4
      %s186 = int_to_ptr.vmem [resolvable:$true] %s185
      %191 = dma.hbm_to_vmem [thread:$0]  %s184, 3072, %s186, [#allocation21], 128, 128, 8
    $region57: #{t3cnn_forward.1} parent=1 // pred_fallthru
      _
    // Predicated region
    $region58: #{t3cnn_forward.1} parent=1 // pred_check
      _
    $region59: #{t3cnn_forward.1} parent=1 // pred_check_branch
      %193 = sbr.rel (0) target = $region61
    $region60: #{t3cnn_forward.1} parent=1 // pred_region
      _
    $region61: #{t3cnn_forward.1} parent=1 // pred_fallthru
      _
    // Predicated region
    $region62: #{t3cnn_forward.1} parent=1 // pred_check
      _
    $region63: #{t3cnn_forward.1} parent=1 // pred_check_branch
      %195 = sbr.rel (0) target = $region65
    $region64: #{t3cnn_forward.1} parent=1 // pred_region
      %197 = vsyncadd [#allocation21], 0
      %s198 = sshll.u32 %s15, 4
      %s199 = int_to_ptr.hbm [resolvable:$true] %s198
      %s200 = sshll.u32 [#allocation22], 4
      %s201 = int_to_ptr.vmem [resolvable:$true] %s200
      %206 = dma.hbm_to_vmem [thread:$0]  %s199, 3072, %s201, [#allocation21], 128, 128, 8
    $region65: #{t3cnn_forward.1} parent=1 // pred_fallthru
      _
    // Predicated region
    $region66: #{t3cnn_forward.1} parent=1 // pred_check
      _
    $region67: #{t3cnn_forward.1} parent=1 // pred_check_branch
      %208 = sbr.rel (0) target = $region69
    $region68: #{t3cnn_forward.1} parent=1 // pred_region
      _
    $region69: #{t3cnn_forward.1} parent=1 // pred_fallthru
      _
    // Predicated region
    $region70: #{t3cnn_forward.1} parent=1 // pred_check
      _
    $region71: #{t3cnn_forward.1} parent=1 // pred_check_branch
      %210 = sbr.rel (0) target = $region73
    $region72: #{t3cnn_forward.1} parent=1 // pred_region
      %212 = vsyncadd [#allocation24], 0
      %s213 = sshll.u32 %s17, 4
      %s214 = int_to_ptr.hbm [resolvable:$true] %s213
      %s215 = sshll.u32 [#allocation23], 4
      %s216 = int_to_ptr.vmem [resolvable:$true] %s215
      %221 = dma.hbm_to_vmem [thread:$0]  %s214, 6144, %s216, [#allocation24], 128, 128, 8
    $region73: #{t3cnn_forward.1} parent=1 // pred_fallthru
      _
    // Predicated region
    $region74: #{t3cnn_forward.1} parent=1 // pred_check
      _
    $region75: #{t3cnn_forward.1} parent=1 // pred_check_branch
      %223 = sbr.rel (0) target = $region77
    $region76: #{t3cnn_forward.1} parent=1 // pred_region
      _
    $region77: #{t3cnn_forward.1} parent=1 // pred_fallthru
      _
    // Predicated region
    $region78: #{t3cnn_forward.1} parent=1 // pred_check
      _
    $region79: #{t3cnn_forward.1} parent=1 // pred_check_branch
      %225 = sbr.rel (0) target = $region81
    $region80: #{t3cnn_forward.1} parent=1 // pred_region
      _
    $region81: #{t3cnn_forward.1} parent=1 // pred_fallthru
      _
    // Predicated region
    $region82: #{t3cnn_forward.1} parent=1 // pred_check
      _
    $region83: #{t3cnn_forward.1} parent=1 // pred_check_branch
      %227 = sbr.rel (0) target = $region85
    $region84: #{t3cnn_forward.1} parent=1 // pred_region
      %229 = vsyncadd [#allocation24], 0
      %s230 = sshll.u32 %s20, 4
      %s231 = int_to_ptr.hbm [resolvable:$true] %s230
      %s232 = sshll.u32 [#allocation25], 4
      %s233 = int_to_ptr.vmem [resolvable:$true] %s232
      %238 = dma.hbm_to_vmem [thread:$0]  %s231, 2048, %s233, [#allocation24], 128, 128, 8
    $region85: #{t3cnn_forward.1} parent=1 // pred_fallthru
      _
    // Predicated region
    $region86: #{t3cnn_forward.1} parent=1 // pred_check
      _
    $region87: #{t3cnn_forward.1} parent=1 // pred_check_branch
      %240 = sbr.rel (0) target = $region89
    $region88: #{t3cnn_forward.1} parent=1 // pred_region
      _
    $region89: #{t3cnn_forward.1} parent=1 // pred_fallthru
      _
    // Predicated region
    $region90: #{t3cnn_forward.1} parent=1 // pred_check
      _
    $region91: #{t3cnn_forward.1} parent=1 // pred_check_branch
      %242 = sbr.rel (0) target = $region93
    $region92: #{t3cnn_forward.1} parent=1 // pred_region
      %244 = dma.done [#allocation3], 512
    $region93: #{t3cnn_forward.1} parent=1 // pred_fallthru
      _
    // Predicated region
    $region94: #{t3cnn_forward.1} parent=1 // pred_check
      _
    $region95: #{t3cnn_forward.1} parent=1 // pred_check_branch
      %246 = sbr.rel (0) target = $region97
    $region96: #{t3cnn_forward.1} parent=1 // pred_region
      %248 = dma.done [#allocation6], 1536
    $region97: #{t3cnn_forward.1} parent=1 // pred_fallthru
      _
    // Predicated region
    $region98: #{t3cnn_forward.1} parent=1 // pred_check
      _
    $region99: #{t3cnn_forward.1} parent=1 // pred_check_branch
      %250 = sbr.rel (0) target = $region101
    $region100: #{t3cnn_forward.1} parent=1 // pred_region
      %252 = dma.done [#allocation6], 768
    $region101: #{t3cnn_forward.1} parent=1 // pred_fallthru
      _
    // Predicated region
    $region102: #{t3cnn_forward.1} parent=1 // pred_check
      _
    $region103: #{t3cnn_forward.1} parent=1 // pred_check_branch
      %254 = sbr.rel (0) target = $region105
    $region104: #{t3cnn_forward.1} parent=1 // pred_region
      %256 = dma.done [#allocation9], 16
    $region105: #{t3cnn_forward.1} parent=1 // pred_fallthru
      _
    // Predicated region
    $region106: #{t3cnn_forward.1} parent=1 // pred_check
      _
    $region107: #{t3cnn_forward.1} parent=1 // pred_check_branch
      %258 = sbr.rel (0) target = $region109
    $region108: #{t3cnn_forward.1} parent=1 // pred_region
      %260 = dma.done [#allocation9], 1152
    $region109: #{t3cnn_forward.1} parent=1 // pred_fallthru
      _
    // Predicated region
    $region110: #{t3cnn_forward.1} parent=1 // pred_check
      _
    $region111: #{t3cnn_forward.1} parent=1 // pred_check_branch
      %262 = sbr.rel (0) target = $region113
    $region112: #{t3cnn_forward.1} parent=1 // pred_region
      %264 = dma.done [#allocation12], 2304
    $region113: #{t3cnn_forward.1} parent=1 // pred_fallthru
      _
    // Predicated region
    $region114: #{t3cnn_forward.1} parent=1 // pred_check
      _
    $region115: #{t3cnn_forward.1} parent=1 // pred_check_branch
      %266 = sbr.rel (0) target = $region117
    $region116: #{t3cnn_forward.1} parent=1 // pred_region
      %268 = dma.done [#allocation12], 16
    $region117: #{t3cnn_forward.1} parent=1 // pred_fallthru
      _
    // Predicated region
    $region118: #{t3cnn_forward.1} parent=1 // pred_check
      _
    $region119: #{t3cnn_forward.1} parent=1 // pred_check_branch
      %270 = sbr.rel (0) target = $region121
    $region120: #{t3cnn_forward.1} parent=1 // pred_region
      %272 = dma.done [#allocation15], 256
    $region121: #{t3cnn_forward.1} parent=1 // pred_fallthru
      _
    // Predicated region
    $region122: #{t3cnn_forward.1} parent=1 // pred_check
      _
    $region123: #{t3cnn_forward.1} parent=1 // pred_check_branch
      %274 = sbr.rel (0) target = $region125
    $region124: #{t3cnn_forward.1} parent=1 // pred_region
      %276 = dma.done [#allocation15], 512
    $region125: #{t3cnn_forward.1} parent=1 // pred_fallthru
      _
    // Predicated region
    $region126: #{t3cnn_forward.1} parent=1 // pred_check
      _
    $region127: #{t3cnn_forward.1} parent=1 // pred_check_branch
      %278 = sbr.rel (0) target = $region129
    $region128: #{t3cnn_forward.1} parent=1 // pred_region
      %280 = dma.done [#allocation18], 768
    $region129: #{t3cnn_forward.1} parent=1 // pred_fallthru
      _
    // Predicated region
    $region130: #{t3cnn_forward.1} parent=1 // pred_check
      _
    $region131: #{t3cnn_forward.1} parent=1 // pred_check_branch
      %282 = sbr.rel (0) target = $region133
    $region132: #{t3cnn_forward.1} parent=1 // pred_region
      %284 = dma.done [#allocation18], 3072
    $region133: #{t3cnn_forward.1} parent=1 // pred_fallthru
      _
    // Predicated region
    $region134: #{t3cnn_forward.1} parent=1 // pred_check
      _
    $region135: #{t3cnn_forward.1} parent=1 // pred_check_branch
      %286 = sbr.rel (0) target = $region137
    $region136: #{t3cnn_forward.1} parent=1 // pred_region
      %288 = dma.done [#allocation21], 3072
    $region137: #{t3cnn_forward.1} parent=1 // pred_fallthru
      _
    // Predicated region
    $region138: #{t3cnn_forward.1} parent=1 // pred_check
      _
    $region139: #{t3cnn_forward.1} parent=1 // pred_check_branch
      %290 = sbr.rel (0) target = $region141
    $region140: #{t3cnn_forward.1} parent=1 // pred_region
      %292 = dma.done [#allocation21], 3072
    $region141: #{t3cnn_forward.1} parent=1 // pred_fallthru
      _
    // Predicated region
    $region142: #{t3cnn_forward.1} parent=1 // pred_check
      _
    $region143: #{t3cnn_forward.1} parent=1 // pred_check_branch
      %294 = sbr.rel (0) target = $region145
    $region144: #{t3cnn_forward.1} parent=1 // pred_region
      %296 = dma.done [#allocation24], 6144
    $region145: #{t3cnn_forward.1} parent=1 // pred_fallthru
      _
    // Predicated region
    $region146: #{t3cnn_forward.1} parent=1 // pred_check
      _
    $region147: #{t3cnn_forward.1} parent=1 // pred_check_branch
      %298 = sbr.rel (0) target = $region149
    $region148: #{t3cnn_forward.1} parent=1 // pred_region
      %300 = dma.done [#allocation24], 2048
    $region149: #{t3cnn_forward.1} parent=1 // pred_fallthru
      _
    %v301 = vld [vmem:[#allocation2] sm:$0xff]
    %v302 = vld [vmem:[#allocation2 + $0x8] sm:$0xff]
    %v303 = vld [vmem:[#allocation2 + $0x10] sm:$0xff]
    %v304 = vld [vmem:[#allocation2 + $0x18] sm:$0xff]
    %v305 = vld [vmem:[#allocation5] sm:$0xff]
    %v306 = vld [vmem:[#allocation5 + $0x8] sm:$0xff]
    %v307 = vld [vmem:[#allocation5 + $0x10] sm:$0xff]
    %v308 = vld [vmem:[#allocation5 + $0x18] sm:$0xf]
    %vm309 = vcmask 261120
    %v311 = vsel %vm309, %v305, 0
    %v314 = vsel %vm309, %v306, 0
    %v317 = vsel %vm309, %v307, 0
    %v320 = vsel %vm309, %v308, 0
    %322 = vmatpush.msra.mxu0 0.0
    %323 = vmatpush.msra.mxu0 0.0
    %324 = vmatpush.msra.mxu0 0.0
    %325 = vmatpush.msra.mxu0 0.0
    %326 = vmatpush.msra.mxu0 0.0
    %327 = vmatpush.msra.mxu0 0.0
    %328 = vmatpush.msra.mxu0 0.0
    %329 = vmatpush.msra.mxu0 0.0
    %330 = vmatpush.msra.mxu0 0.0
    %331 = vmatpush.msra.mxu0 0.0
    %332 = vmatpush.msra.mxu0 0.0
    %333 = vmatpush.msra.mxu0 0.0
    %334 = vmatpush.msra.mxu0 %v304
    %335 = vmatpush.msra.mxu0 %v303
    %336 = vmatpush.msra.mxu0 %v302
    %337 = vmatpush.msra.mxu0 %v301
    %338 = vmatmul.f32.gmra.mxu0 %v311
    %v339 = vpop.f32.mrf.mxu0
    %v340 = vadd.f32 0.0, %v339
    %341 = vmatmul.f32.gmra.mxu0 %v314
    %v342 = vpop.f32.mrf.mxu0
    %v343 = vadd.f32 0.0, %v342
    %344 = vmatmul.f32.gmra.mxu0 %v317
    %v345 = vpop.f32.mrf.mxu0
    %v346 = vadd.f32 0.0, %v345
    %347 = vmatmul.f32.gmra.mxu0 %v320
    %v348 = vpop.f32.mrf.mxu0
    %v349 = vadd.f32 0.0, %v348
    %350 = vdwg.mxu0
    %v351 = vld [vmem:[#allocation7] sm:$0xff]
    %v352 = vld [vmem:[#allocation7 + $0x8] sm:$0xff]
    %s353 = scalar_lea.vmem [#allocation5], 32
    %v354 = vld [vmem:[%s353] sm:$0xff]
    %v355 = vld [vmem:[%s353 + $0x8] sm:$0xff]
    %v356 = vld [vmem:[%s353 + $0x10] sm:$0xff]
    %v357 = vld [vmem:[%s353 + $0x18] sm:$0xf]
    %v359 = vsel %vm309, %v354, 0
    %v362 = vsel %vm309, %v355, 0
    %v365 = vsel %vm309, %v356, 0
    %v368 = vsel %vm309, %v357, 0
    %370 = vmatpush.msra.mxu0 0.0
    %371 = vmatpush.msra.mxu0 0.0
    %372 = vmatpush.msra.mxu0 0.0
    %373 = vmatpush.msra.mxu0 0.0
    %374 = vmatpush.msra.mxu0 0.0
    %375 = vmatpush.msra.mxu0 0.0
    %376 = vmatpush.msra.mxu0 0.0
    %377 = vmatpush.msra.mxu0 0.0
    %378 = vmatpush.msra.mxu0 0.0
    %379 = vmatpush.msra.mxu0 0.0
    %380 = vmatpush.msra.mxu0 0.0
    %381 = vmatpush.msra.mxu0 0.0
    %382 = vmatpush.msra.mxu0 %v304
    %383 = vmatpush.msra.mxu0 %v303
    %384 = vmatpush.msra.mxu0 %v302
    %385 = vmatpush.msra.mxu0 %v301
    %386 = vmatmul.f32.gmra.mxu0 %v359
    %v387 = vpop.f32.mrf.mxu0
    %v388 = vadd.f32 0.0, %v387
    %389 = vmatmul.f32.gmra.mxu0 %v362
    %v390 = vpop.f32.mrf.mxu0
    %v391 = vadd.f32 0.0, %v390
    %392 = vmatmul.f32.gmra.mxu0 %v365
    %v393 = vpop.f32.mrf.mxu0
    %v394 = vadd.f32 0.0, %v393
    %395 = vmatmul.f32.gmra.mxu0 %v368
    %v396 = vpop.f32.mrf.mxu0
    %v397 = vadd.f32 0.0, %v396
    %398 = vdwg.mxu0
    %s399 = scalar_lea.vmem [#allocation7], 16
    %v400 = vld [vmem:[%s399] sm:$0xff]
    %v401 = vld [vmem:[%s399 + $0x8] sm:$0xff]
    %vm402 = vcmask 130048
    %v404 = vsel %vm402, %v388, 0
    %v407 = vsel %vm402, %v391, 0
    %v410 = vsel %vm402, %v394, 0
    %v413 = vsel %vm402, %v397, 0
    %415 = vmatpush.msra.mxu0 0.0
    %416 = vmatpush.msra.mxu0 0.0
    %417 = vmatpush.msra.mxu0 0.0
    %418 = vmatpush.msra.mxu0 0.0
    %419 = vmatpush.msra.mxu0 0.0
    %420 = vmatpush.msra.mxu0 0.0
    %421 = vmatpush.msra.mxu0 0.0
    %422 = vmatpush.msra.mxu0 0.0
    %423 = vmatpush.msra.mxu0 0.0
    %424 = vmatpush.msra.mxu0 0.0
    %425 = vmatpush.msra.mxu0 0.0
    %426 = vmatpush.msra.mxu0 0.0
    %427 = vmatpush.msra.mxu0 0.0
    %428 = vmatpush.msra.mxu0 0.0
    %429 = vmatpush.msra.mxu0 %v401
    %430 = vmatpush.msra.mxu0 %v400
    %431 = vmatmul.f32.gmra.mxu0 %v404
    %v432 = vpop.f32.mrf.mxu0
    %v433 = vadd.f32 0.0, %v432
    %434 = vmatmul.f32.gmra.mxu0 %v407
    %v435 = vpop.f32.mrf.mxu0
    %v436 = vadd.f32 0.0, %v435
    %437 = vmatmul.f32.gmra.mxu0 %v410
    %v438 = vpop.f32.mrf.mxu0
    %v439 = vadd.f32 0.0, %v438
    %440 = vmatmul.f32.gmra.mxu0 %v413
    %v441 = vpop.f32.mrf.mxu0
    %v442 = vadd.f32 0.0, %v441
    %443 = vdwg.mxu0
    %v445 = vsel %vm402, %v340, 0
    %v448 = vsel %vm402, %v343, 0
    %v451 = vsel %vm402, %v346, 0
    %v454 = vsel %vm402, %v349, 0
    %456 = vmatpush.msra.mxu0 0.0
    %457 = vmatpush.msra.mxu0 0.0
    %458 = vmatpush.msra.mxu0 0.0
    %459 = vmatpush.msra.mxu0 0.0
    %460 = vmatpush.msra.mxu0 0.0
    %461 = vmatpush.msra.mxu0 0.0
    %462 = vmatpush.msra.mxu0 0.0
    %463 = vmatpush.msra.mxu0 0.0
    %464 = vmatpush.msra.mxu0 0.0
    %465 = vmatpush.msra.mxu0 0.0
    %466 = vmatpush.msra.mxu0 0.0
    %467 = vmatpush.msra.mxu0 0.0
    %468 = vmatpush.msra.mxu0 0.0
    %469 = vmatpush.msra.mxu0 0.0
    %470 = vmatpush.msra.mxu0 %v352
    %471 = vmatpush.msra.mxu0 %v351
    %472 = vmatmul.f32.gmra.mxu0 %v445
    %v473 = vpop.f32.mrf.mxu0
    %v474 = vadd.f32 %v433, %v473
    %475 = vmatmul.f32.gmra.mxu0 %v448
    %v476 = vpop.f32.mrf.mxu0
    %v477 = vadd.f32 %v436, %v476
    %478 = vmatmul.f32.gmra.mxu0 %v451
    %v479 = vpop.f32.mrf.mxu0
    %v480 = vadd.f32 %v439, %v479
    %481 = vmatmul.f32.gmra.mxu0 %v454
    %v482 = vpop.f32.mrf.mxu0
    %v483 = vadd.f32 %v442, %v482
    %484 = vdwg.mxu0
    %s485 = scalar_lea.vmem [#allocation5], 64
    %v486 = vld [vmem:[%s485] sm:$0xff]
    %v487 = vld [vmem:[%s485 + $0x8] sm:$0xff]
    %v488 = vld [vmem:[%s485 + $0x10] sm:$0xff]
    %v489 = vld [vmem:[%s485 + $0x18] sm:$0xf]
    %v491 = vsel %vm309, %v486, 0
    %v494 = vsel %vm309, %v487, 0
    %v497 = vsel %vm309, %v488, 0
    %v500 = vsel %vm309, %v489, 0
    %502 = vmatpush.msra.mxu0 0.0
    %503 = vmatpush.msra.mxu0 0.0
    %504 = vmatpush.msra.mxu0 0.0
    %505 = vmatpush.msra.mxu0 0.0
    %506 = vmatpush.msra.mxu0 0.0
    %507 = vmatpush.msra.mxu0 0.0
    %508 = vmatpush.msra.mxu0 0.0
    %509 = vmatpush.msra.mxu0 0.0
    %510 = vmatpush.msra.mxu0 0.0
    %511 = vmatpush.msra.mxu0 0.0
    %512 = vmatpush.msra.mxu0 0.0
    %513 = vmatpush.msra.mxu0 0.0
    %514 = vmatpush.msra.mxu0 %v304
    %515 = vmatpush.msra.mxu0 %v303
    %516 = vmatpush.msra.mxu0 %v302
    %517 = vmatpush.msra.mxu0 %v301
    %518 = vmatmul.f32.gmra.mxu0 %v491
    %v519 = vpop.f32.mrf.mxu0
    %v520 = vadd.f32 0.0, %v519
    %521 = vmatmul.f32.gmra.mxu0 %v494
    %v522 = vpop.f32.mrf.mxu0
    %v523 = vadd.f32 0.0, %v522
    %524 = vmatmul.f32.gmra.mxu0 %v497
    %v525 = vpop.f32.mrf.mxu0
    %v526 = vadd.f32 0.0, %v525
    %527 = vmatmul.f32.gmra.mxu0 %v500
    %v528 = vpop.f32.mrf.mxu0
    %v529 = vadd.f32 0.0, %v528
    %530 = vdwg.mxu0
    %s531 = scalar_lea.vmem [#allocation7], 32
    %v532 = vld [vmem:[%s531] sm:$0xff]
    %v533 = vld [vmem:[%s531 + $0x8] sm:$0xff]
    %v535 = vsel %vm402, %v520, 0
    %v538 = vsel %vm402, %v523, 0
    %v541 = vsel %vm402, %v526, 0
    %v544 = vsel %vm402, %v529, 0
    %546 = vmatpush.msra.mxu0 0.0
    %547 = vmatpush.msra.mxu0 0.0
    %548 = vmatpush.msra.mxu0 0.0
    %549 = vmatpush.msra.mxu0 0.0
    %550 = vmatpush.msra.mxu0 0.0
    %551 = vmatpush.msra.mxu0 0.0
    %552 = vmatpush.msra.mxu0 0.0
    %553 = vmatpush.msra.mxu0 0.0
    %554 = vmatpush.msra.mxu0 0.0
    %555 = vmatpush.msra.mxu0 0.0
    %556 = vmatpush.msra.mxu0 0.0
    %557 = vmatpush.msra.mxu0 0.0
    %558 = vmatpush.msra.mxu0 0.0
    %559 = vmatpush.msra.mxu0 0.0
    %560 = vmatpush.msra.mxu0 %v533
    %561 = vmatpush.msra.mxu0 %v532
    %562 = vmatmul.f32.gmra.mxu0 %v535
    %v563 = vpop.f32.mrf.mxu0
    %v564 = vadd.f32 0.0, %v563
    %565 = vmatmul.f32.gmra.mxu0 %v538
    %v566 = vpop.f32.mrf.mxu0
    %v567 = vadd.f32 0.0, %v566
    %568 = vmatmul.f32.gmra.mxu0 %v541
    %v569 = vpop.f32.mrf.mxu0
    %v570 = vadd.f32 0.0, %v569
    %571 = vmatmul.f32.gmra.mxu0 %v544
    %v572 = vpop.f32.mrf.mxu0
    %v573 = vadd.f32 0.0, %v572
    %574 = vdwg.mxu0
    %v575 = vadd.f32 %v474, %v564
    %v576 = vadd.f32 %v477, %v567
    %v577 = vadd.f32 %v480, %v570
    %v578 = vadd.f32 %v483, %v573
    %v579 = vld [vmem:[#allocation8] sm:$0x1]
    %v581 = vperm.slane %v579, 0
    %v583 = vadd.f32 %v575, %v581
    %v584 = vadd.f32 %v576, %v581
    %v585 = vadd.f32 %v577, %v581
    %v586 = vadd.f32 %v578, %v581
    %v587 = vmax.f32 %v583, 0.0
    %v588 = vmax.f32 %v584, 0.0
    %v589 = vmax.f32 %v585, 0.0
    %v590 = vmax.f32 %v586, 0.0
    %v591 = vld [vmem:[#allocation10] sm:$0xff]
    %v592 = vld [vmem:[#allocation10 + $0x8] sm:$0xff]
    %v593 = vld [vmem:[#allocation10 + $0x10] sm:$0xff]
    %vm594 = vcmask 228352
    %v596 = vsel %vm594, %v591, 0
    %v599 = vsel %vm594, %v592, 0
    %v602 = vsel %vm594, %v593, 0
    %vm604 = vcmask 1043456
    %v606 = vsel %vm604, %v590, 0
    %608 = vmatpush.msra.mxu0 0.0
    %609 = vmatpush.msra.mxu0 0.0
    %610 = vmatpush.msra.mxu0 0.0
    %611 = vmatpush.msra.mxu0 0.0
    %612 = vmatpush.msra.mxu0 0.0
    %613 = vmatpush.msra.mxu0 0.0
    %614 = vmatpush.msra.mxu0 0.0
    %615 = vmatpush.msra.mxu0 0.0
    %616 = vmatpush.msra.mxu0 0.0
    %617 = vmatpush.msra.mxu0 0.0
    %618 = vmatpush.msra.mxu0 0.0
    %619 = vmatpush.msra.mxu0 0.0
    %620 = vmatpush.msra.mxu0 %v606
    %621 = vmatpush.msra.mxu0 %v589
    %622 = vmatpush.msra.mxu0 %v588
    %623 = vmatpush.msra.mxu0 %v587
    %624 = vmatmul.f32.gmra.mxu0 %v596
    %v625 = vpop.f32.mrf.mxu0
    %v626 = vadd.f32 0.0, %v625
    %627 = vmatmul.f32.gmra.mxu0 %v599
    %v628 = vpop.f32.mrf.mxu0
    %v629 = vadd.f32 0.0, %v628
    %630 = vmatmul.f32.gmra.mxu0 %v602
    %v631 = vpop.f32.mrf.mxu0
    %v632 = vadd.f32 0.0, %v631
    %633 = vdwg.mxu0
    %v634 = vld [vmem:[#allocation11] sm:$0xff]
    %v635 = vld [vmem:[#allocation11 + $0x8] sm:$0xff]
    %v636 = vld [vmem:[#allocation11 + $0x10] sm:$0xff]
    %v637 = vld [vmem:[#allocation11 + $0x18] sm:$0xff]
    %v638 = vld [vmem:[#allocation11 + $0x20] sm:$0xff]
    %v639 = vld [vmem:[#allocation11 + $0x28] sm:$0xff]
    %s640 = scalar_lea.vmem [#allocation10], 24
    %v641 = vld [vmem:[%s640] sm:$0xff]
    %v642 = vld [vmem:[%s640 + $0x8] sm:$0xff]
    %v643 = vld [vmem:[%s640 + $0x10] sm:$0xff]
    %v645 = vsel %vm594, %v641, 0
    %v648 = vsel %vm594, %v642, 0
    %v651 = vsel %vm594, %v643, 0
    %653 = vmatpush.msra.mxu0 0.0
    %654 = vmatpush.msra.mxu0 0.0
    %655 = vmatpush.msra.mxu0 0.0
    %656 = vmatpush.msra.mxu0 0.0
    %657 = vmatpush.msra.mxu0 0.0
    %658 = vmatpush.msra.mxu0 0.0
    %659 = vmatpush.msra.mxu0 0.0
    %660 = vmatpush.msra.mxu0 0.0
    %661 = vmatpush.msra.mxu0 0.0
    %662 = vmatpush.msra.mxu0 0.0
    %663 = vmatpush.msra.mxu0 0.0
    %664 = vmatpush.msra.mxu0 0.0
    %665 = vmatpush.msra.mxu0 %v606
    %666 = vmatpush.msra.mxu0 %v589
    %667 = vmatpush.msra.mxu0 %v588
    %668 = vmatpush.msra.mxu0 %v587
    %669 = vmatmul.f32.gmra.mxu0 %v645
    %v670 = vpop.f32.mrf.mxu0
    %v671 = vadd.f32 0.0, %v670
    %672 = vmatmul.f32.gmra.mxu0 %v648
    %v673 = vpop.f32.mrf.mxu0
    %v674 = vadd.f32 0.0, %v673
    %675 = vmatmul.f32.gmra.mxu0 %v651
    %v676 = vpop.f32.mrf.mxu0
    %v677 = vadd.f32 0.0, %v676
    %678 = vdwg.mxu0
    %s679 = scalar_lea.vmem [#allocation11], 48
    %v680 = vld [vmem:[%s679] sm:$0xff]
    %v681 = vld [vmem:[%s679 + $0x8] sm:$0xff]
    %v682 = vld [vmem:[%s679 + $0x10] sm:$0xff]
    %v683 = vld [vmem:[%s679 + $0x18] sm:$0xff]
    %v684 = vld [vmem:[%s679 + $0x20] sm:$0xff]
    %v685 = vld [vmem:[%s679 + $0x28] sm:$0xff]
    %vm686 = vcmask 392192
    %v688 = vsel %vm686, %v671, 0
    %v691 = vsel %vm686, %v674, 0
    %v694 = vsel %vm686, %v677, 0
    %696 = vmatpush.msra.mxu0 0.0
    %697 = vmatpush.msra.mxu0 0.0
    %698 = vmatpush.msra.mxu0 0.0
    %699 = vmatpush.msra.mxu0 0.0
    %700 = vmatpush.msra.mxu0 0.0
    %701 = vmatpush.msra.mxu0 0.0
    %702 = vmatpush.msra.mxu0 0.0
    %703 = vmatpush.msra.mxu0 0.0
    %704 = vmatpush.msra.mxu0 0.0
    %705 = vmatpush.msra.mxu0 0.0
    %706 = vmatpush.msra.mxu0 %v685
    %707 = vmatpush.msra.mxu0 %v684
    %708 = vmatpush.msra.mxu0 %v683
    %709 = vmatpush.msra.mxu0 %v682
    %710 = vmatpush.msra.mxu0 %v681
    %711 = vmatpush.msra.mxu0 %v680
    %712 = vmatmul.f32.gmra.mxu0 %v688
    %v713 = vpop.f32.mrf.mxu0
    %v714 = vadd.f32 0.0, %v713
    %715 = vmatmul.f32.gmra.mxu0 %v691
    %v716 = vpop.f32.mrf.mxu0
    %v717 = vadd.f32 0.0, %v716
    %718 = vmatmul.f32.gmra.mxu0 %v694
    %v719 = vpop.f32.mrf.mxu0
    %v720 = vadd.f32 0.0, %v719
    %721 = vdwg.mxu0
    %v723 = vsel %vm686, %v626, 0
    %v726 = vsel %vm686, %v629, 0
    %v729 = vsel %vm686, %v632, 0
    %731 = vmatpush.msra.mxu0 0.0
    %732 = vmatpush.msra.mxu0 0.0
    %733 = vmatpush.msra.mxu0 0.0
    %734 = vmatpush.msra.mxu0 0.0
    %735 = vmatpush.msra.mxu0 0.0
    %736 = vmatpush.msra.mxu0 0.0
    %737 = vmatpush.msra.mxu0 0.0
    %738 = vmatpush.msra.mxu0 0.0
    %739 = vmatpush.msra.mxu0 0.0
    %740 = vmatpush.msra.mxu0 0.0
    %741 = vmatpush.msra.mxu0 %v639
    %742 = vmatpush.msra.mxu0 %v638
    %743 = vmatpush.msra.mxu0 %v637
    %744 = vmatpush.msra.mxu0 %v636
    %745 = vmatpush.msra.mxu0 %v635
    %746 = vmatpush.msra.mxu0 %v634
    %747 = vmatmul.f32.gmra.mxu0 %v723
    %v748 = vpop.f32.mrf.mxu0
    %v749 = vadd.f32 %v714, %v748
    %750 = vmatmul.f32.gmra.mxu0 %v726
    %v751 = vpop.f32.mrf.mxu0
    %v752 = vadd.f32 %v717, %v751
    %753 = vmatmul.f32.gmra.mxu0 %v729
    %v754 = vpop.f32.mrf.mxu0
    %v755 = vadd.f32 %v720, %v754
    %756 = vdwg.mxu0
    %s757 = scalar_lea.vmem [#allocation10], 48
    %v758 = vld [vmem:[%s757] sm:$0xff]
    %v759 = vld [vmem:[%s757 + $0x8] sm:$0xff]
    %v760 = vld [vmem:[%s757 + $0x10] sm:$0xff]
    %v762 = vsel %vm594, %v758, 0
    %v765 = vsel %vm594, %v759, 0
    %v768 = vsel %vm594, %v760, 0
    %770 = vmatpush.msra.mxu0 0.0
    %771 = vmatpush.msra.mxu0 0.0
    %772 = vmatpush.msra.mxu0 0.0
    %773 = vmatpush.msra.mxu0 0.0
    %774 = vmatpush.msra.mxu0 0.0
    %775 = vmatpush.msra.mxu0 0.0
    %776 = vmatpush.msra.mxu0 0.0
    %777 = vmatpush.msra.mxu0 0.0
    %778 = vmatpush.msra.mxu0 0.0
    %779 = vmatpush.msra.mxu0 0.0
    %780 = vmatpush.msra.mxu0 0.0
    %781 = vmatpush.msra.mxu0 0.0
    %782 = vmatpush.msra.mxu0 %v606
    %783 = vmatpush.msra.mxu0 %v589
    %784 = vmatpush.msra.mxu0 %v588
    %785 = vmatpush.msra.mxu0 %v587
    %786 = vmatmul.f32.gmra.mxu0 %v762
    %v787 = vpop.f32.mrf.mxu0
    %v788 = vadd.f32 0.0, %v787
    %789 = vmatmul.f32.gmra.mxu0 %v765
    %v790 = vpop.f32.mrf.mxu0
    %v791 = vadd.f32 0.0, %v790
    %792 = vmatmul.f32.gmra.mxu0 %v768
    %v793 = vpop.f32.mrf.mxu0
    %v794 = vadd.f32 0.0, %v793
    %795 = vdwg.mxu0
    %s796 = scalar_lea.vmem [#allocation11], 96
    %v797 = vld [vmem:[%s796] sm:$0xff]
    %v798 = vld [vmem:[%s796 + $0x8] sm:$0xff]
    %v799 = vld [vmem:[%s796 + $0x10] sm:$0xff]
    %v800 = vld [vmem:[%s796 + $0x18] sm:$0xff]
    %v801 = vld [vmem:[%s796 + $0x20] sm:$0xff]
    %v802 = vld [vmem:[%s796 + $0x28] sm:$0xff]
    %v804 = vsel %vm686, %v788, 0
    %v807 = vsel %vm686, %v791, 0
    %v810 = vsel %vm686, %v794, 0
    %812 = vmatpush.msra.mxu0 0.0
    %813 = vmatpush.msra.mxu0 0.0
    %814 = vmatpush.msra.mxu0 0.0
    %815 = vmatpush.msra.mxu0 0.0
    %816 = vmatpush.msra.mxu0 0.0
    %817 = vmatpush.msra.mxu0 0.0
    %818 = vmatpush.msra.mxu0 0.0
    %819 = vmatpush.msra.mxu0 0.0
    %820 = vmatpush.msra.mxu0 0.0
    %821 = vmatpush.msra.mxu0 0.0
    %822 = vmatpush.msra.mxu0 %v802
    %823 = vmatpush.msra.mxu0 %v801
    %824 = vmatpush.msra.mxu0 %v800
    %825 = vmatpush.msra.mxu0 %v799
    %826 = vmatpush.msra.mxu0 %v798
    %827 = vmatpush.msra.mxu0 %v797
    %828 = vmatmul.f32.gmra.mxu0 %v804
    %v829 = vpop.f32.mrf.mxu0
    %v830 = vadd.f32 0.0, %v829
    %831 = vmatmul.f32.gmra.mxu0 %v807
    %v832 = vpop.f32.mrf.mxu0
    %v833 = vadd.f32 0.0, %v832
    %834 = vmatmul.f32.gmra.mxu0 %v810
    %v835 = vpop.f32.mrf.mxu0
    %v836 = vadd.f32 0.0, %v835
    %837 = vdwg.mxu0
    %v838 = vadd.f32 %v749, %v830
    %v839 = vadd.f32 %v752, %v833
    %v840 = vadd.f32 %v755, %v836
    %v841 = vld [vmem:[#allocation13] sm:$0x1]
    %v843 = vperm.slane %v841, 0
    %v845 = vadd.f32 %v838, %v843
    %v846 = vadd.f32 %v839, %v843
    %v847 = vadd.f32 %v840, %v843
    %v848 = vmax.f32 %v845, 0.0
    %v849 = vmax.f32 %v846, 0.0
    %v850 = vmax.f32 %v847, 0.0
    %v851 = vld [vmem:[#allocation14] sm:$0xff]
    %v852 = vld [vmem:[#allocation14 + $0x8] sm:$0x3f]
    %vm853 = vcmask 195584
    %v855 = vsel %vm853, %v851, 0
    %v858 = vsel %vm853, %v852, 0
    %860 = vmatpush.msra.mxu0 0.0
    %861 = vmatpush.msra.mxu0 0.0
    %862 = vmatpush.msra.mxu0 0.0
    %863 = vmatpush.msra.mxu0 0.0
    %864 = vmatpush.msra.mxu0 0.0
    %865 = vmatpush.msra.mxu0 0.0
    %866 = vmatpush.msra.mxu0 0.0
    %867 = vmatpush.msra.mxu0 0.0
    %868 = vmatpush.msra.mxu0 0.0
    %869 = vmatpush.msra.mxu0 0.0
    %870 = vmatpush.msra.mxu0 0.0
    %871 = vmatpush.msra.mxu0 0.0
    %872 = vmatpush.msra.mxu0 0.0
    %873 = vmatpush.msra.mxu0 %v850
    %874 = vmatpush.msra.mxu0 %v849
    %875 = vmatpush.msra.mxu0 %v848
    %876 = vmatmul.f32.gmra.mxu0 %v855
    %v877 = vpop.f32.mrf.mxu0
    %v878 = vadd.f32 0.0, %v877
    %879 = vmatmul.f32.gmra.mxu0 %v858
    %v880 = vpop.f32.mrf.mxu0
    %v881 = vadd.f32 0.0, %v880
    %882 = vdwg.mxu0
    %v883 = vld [vmem:[#allocation16] sm:$0xff]
    %v884 = vld [vmem:[#allocation16 + $0x8] sm:$0xff]
    %v885 = vld [vmem:[#allocation16 + $0x10] sm:$0xff]
    %v886 = vld [vmem:[#allocation16 + $0x18] sm:$0xff]
    %v887 = vld [vmem:[%s9] sm:$0x1]
    %v889 = vperm.slane %v887, 0
    %v892 = vsel %vm309, %v878, 0
    %v895 = vsel %vm309, %v881, 0
    %897 = vmatpush.msra.mxu0 0.0
    %898 = vmatpush.msra.mxu0 0.0
    %899 = vmatpush.msra.mxu0 0.0
    %900 = vmatpush.msra.mxu0 0.0
    %901 = vmatpush.msra.mxu0 0.0
    %902 = vmatpush.msra.mxu0 0.0
    %903 = vmatpush.msra.mxu0 0.0
    %904 = vmatpush.msra.mxu0 0.0
    %905 = vmatpush.msra.mxu0 0.0
    %906 = vmatpush.msra.mxu0 0.0
    %907 = vmatpush.msra.mxu0 0.0
    %908 = vmatpush.msra.mxu0 0.0
    %909 = vmatpush.msra.mxu0 %v886
    %910 = vmatpush.msra.mxu0 %v885
    %911 = vmatpush.msra.mxu0 %v884
    %912 = vmatpush.msra.mxu0 %v883
    %913 = vmatmul.f32.gmra.mxu0 %v892
    %v914 = vpop.f32.mrf.mxu0
    %v915 = vadd.f32 %v889, %v914
    %916 = vmatmul.f32.gmra.mxu0 %v895
    %v917 = vpop.f32.mrf.mxu0
    %v918 = vadd.f32 %v889, %v917
    %919 = vdwg.mxu0
    %v920 = vmax.f32 %v915, 0.0
    %v921 = vmax.f32 %v918, 0.0
    %v922 = vld [vmem:[#allocation17] sm:$0xff]
    %v923 = vld [vmem:[#allocation17 + $0x8] sm:$0x3f]
    %vm924 = vcmask 113664
    %v926 = vsel %vm924, %v922, 0
    %v929 = vsel %vm924, %v923, 0
    %vm931 = vcmask 1045504
    %v933 = vsel %vm931, %v921, 0
    %935 = vmatpush.msra.mxu0 0.0
    %936 = vmatpush.msra.mxu0 0.0
    %937 = vmatpush.msra.mxu0 0.0
    %938 = vmatpush.msra.mxu0 0.0
    %939 = vmatpush.msra.mxu0 0.0
    %940 = vmatpush.msra.mxu0 0.0
    %941 = vmatpush.msra.mxu0 0.0
    %942 = vmatpush.msra.mxu0 0.0
    %943 = vmatpush.msra.mxu0 0.0
    %944 = vmatpush.msra.mxu0 0.0
    %945 = vmatpush.msra.mxu0 0.0
    %946 = vmatpush.msra.mxu0 0.0
    %947 = vmatpush.msra.mxu0 0.0
    %948 = vmatpush.msra.mxu0 0.0
    %949 = vmatpush.msra.mxu0 %v933
    %950 = vmatpush.msra.mxu0 %v920
    %951 = vmatmul.f32.gmra.mxu0 %v926
    %v952 = vpop.f32.mrf.mxu0
    %v953 = vadd.f32 0.0, %v952
    %954 = vmatmul.f32.gmra.mxu0 %v929
    %v955 = vpop.f32.mrf.mxu0
    %v956 = vadd.f32 0.0, %v955
    %957 = vdwg.mxu0
    %v958 = vld [vmem:[#allocation19] sm:$0xff]
    %v959 = vld [vmem:[#allocation19 + $0x8] sm:$0xff]
    %v960 = vld [vmem:[#allocation19 + $0x10] sm:$0xff]
    %v961 = vld [vmem:[#allocation19 + $0x18] sm:$0xff]
    %v962 = vld [vmem:[#allocation19 + $0x20] sm:$0xff]
    %v963 = vld [vmem:[#allocation19 + $0x28] sm:$0xff]
    %v964 = vld [vmem:[#allocation19 + $0x30] sm:$0xff]
    %v965 = vld [vmem:[#allocation19 + $0x38] sm:$0xff]
    %s966 = scalar_lea.vmem [#allocation17], 16
    %v967 = vld [vmem:[%s966] sm:$0xff]
    %v968 = vld [vmem:[%s966 + $0x8] sm:$0x3f]
    %v970 = vsel %vm924, %v967, 0
    %v973 = vsel %vm924, %v968, 0
    %975 = vmatpush.msra.mxu0 0.0
    %976 = vmatpush.msra.mxu0 0.0
    %977 = vmatpush.msra.mxu0 0.0
    %978 = vmatpush.msra.mxu0 0.0
    %979 = vmatpush.msra.mxu0 0.0
    %980 = vmatpush.msra.mxu0 0.0
    %981 = vmatpush.msra.mxu0 0.0
    %982 = vmatpush.msra.mxu0 0.0
    %983 = vmatpush.msra.mxu0 0.0
    %984 = vmatpush.msra.mxu0 0.0
    %985 = vmatpush.msra.mxu0 0.0
    %986 = vmatpush.msra.mxu0 0.0
    %987 = vmatpush.msra.mxu0 0.0
    %988 = vmatpush.msra.mxu0 0.0
    %989 = vmatpush.msra.mxu0 %v933
    %990 = vmatpush.msra.mxu0 %v920
    %991 = vmatmul.f32.gmra.mxu0 %v970
    %v992 = vpop.f32.mrf.mxu0
    %v993 = vadd.f32 0.0, %v992
    %994 = vmatmul.f32.gmra.mxu0 %v973
    %v995 = vpop.f32.mrf.mxu0
    %v996 = vadd.f32 0.0, %v995
    %997 = vdwg.mxu0
    %s998 = scalar_lea.vmem [#allocation19], 64
    %v999 = vld [vmem:[%s998] sm:$0xff]
    %v1000 = vld [vmem:[%s998 + $0x8] sm:$0xff]
    %v1001 = vld [vmem:[%s998 + $0x10] sm:$0xff]
    %v1002 = vld [vmem:[%s998 + $0x18] sm:$0xff]
    %v1003 = vld [vmem:[%s998 + $0x20] sm:$0xff]
    %v1004 = vld [vmem:[%s998 + $0x28] sm:$0xff]
    %v1005 = vld [vmem:[%s998 + $0x30] sm:$0xff]
    %v1006 = vld [vmem:[%s998 + $0x38] sm:$0xff]
    %vm1007 = vcmask 523264
    %v1009 = vsel %vm1007, %v993, 0
    %v1012 = vsel %vm1007, %v996, 0
    %1014 = vmatpush.msra.mxu0 0.0
    %1015 = vmatpush.msra.mxu0 0.0
    %1016 = vmatpush.msra.mxu0 0.0
    %1017 = vmatpush.msra.mxu0 0.0
    %1018 = vmatpush.msra.mxu0 0.0
    %1019 = vmatpush.msra.mxu0 0.0
    %1020 = vmatpush.msra.mxu0 0.0
    %1021 = vmatpush.msra.mxu0 0.0
    %1022 = vmatpush.msra.mxu0 %v1006
    %1023 = vmatpush.msra.mxu0 %v1005
    %1024 = vmatpush.msra.mxu0 %v1004
    %1025 = vmatpush.msra.mxu0 %v1003
    %1026 = vmatpush.msra.mxu0 %v1002
    %1027 = vmatpush.msra.mxu0 %v1001
    %1028 = vmatpush.msra.mxu0 %v1000
    %1029 = vmatpush.msra.mxu0 %v999
    %1030 = vmatmul.f32.gmra.mxu0 %v1009
    %v1031 = vpop.f32.mrf.mxu0
    %v1032 = vadd.f32 0.0, %v1031
    %1033 = vmatmul.f32.gmra.mxu0 %v1012
    %v1034 = vpop.f32.mrf.mxu0
    %v1035 = vadd.f32 0.0, %v1034
    %1036 = vdwg.mxu0
    %v1038 = vsel %vm1007, %v953, 0
    %v1041 = vsel %vm1007, %v956, 0
    %1043 = vmatpush.msra.mxu0 0.0
    %1044 = vmatpush.msra.mxu0 0.0
    %1045 = vmatpush.msra.mxu0 0.0
    %1046 = vmatpush.msra.mxu0 0.0
    %1047 = vmatpush.msra.mxu0 0.0
    %1048 = vmatpush.msra.mxu0 0.0
    %1049 = vmatpush.msra.mxu0 0.0
    %1050 = vmatpush.msra.mxu0 0.0
    %1051 = vmatpush.msra.mxu0 %v965
    %1052 = vmatpush.msra.mxu0 %v964
    %1053 = vmatpush.msra.mxu0 %v963
    %1054 = vmatpush.msra.mxu0 %v962
    %1055 = vmatpush.msra.mxu0 %v961
    %1056 = vmatpush.msra.mxu0 %v960
    %1057 = vmatpush.msra.mxu0 %v959
    %1058 = vmatpush.msra.mxu0 %v958
    %1059 = vmatmul.f32.gmra.mxu0 %v1038
    %v1060 = vpop.f32.mrf.mxu0
    %v1061 = vadd.f32 %v1032, %v1060
    %1062 = vmatmul.f32.gmra.mxu0 %v1041
    %v1063 = vpop.f32.mrf.mxu0
    %v1064 = vadd.f32 %v1035, %v1063
    %1065 = vdwg.mxu0
    %s1066 = scalar_lea.vmem [#allocation17], 32
    %v1067 = vld [vmem:[%s1066] sm:$0xff]
    %v1068 = vld [vmem:[%s1066 + $0x8] sm:$0x3f]
    %v1070 = vsel %vm924, %v1067, 0
    %v1073 = vsel %vm924, %v1068, 0
    %1075 = vmatpush.msra.mxu0 0.0
    %1076 = vmatpush.msra.mxu0 0.0
    %1077 = vmatpush.msra.mxu0 0.0
    %1078 = vmatpush.msra.mxu0 0.0
    %1079 = vmatpush.msra.mxu0 0.0
    %1080 = vmatpush.msra.mxu0 0.0
    %1081 = vmatpush.msra.mxu0 0.0
    %1082 = vmatpush.msra.mxu0 0.0
    %1083 = vmatpush.msra.mxu0 0.0
    %1084 = vmatpush.msra.mxu0 0.0
    %1085 = vmatpush.msra.mxu0 0.0
    %1086 = vmatpush.msra.mxu0 0.0
    %1087 = vmatpush.msra.mxu0 0.0
    %1088 = vmatpush.msra.mxu0 0.0
    %1089 = vmatpush.msra.mxu0 %v933
    %1090 = vmatpush.msra.mxu0 %v920
    %1091 = vmatmul.f32.gmra.mxu0 %v1070
    %v1092 = vpop.f32.mrf.mxu0
    %v1093 = vadd.f32 0.0, %v1092
    %1094 = vmatmul.f32.gmra.mxu0 %v1073
    %v1095 = vpop.f32.mrf.mxu0
    %v1096 = vadd.f32 0.0, %v1095
    %1097 = vdwg.mxu0
    %s1098 = scalar_lea.vmem [#allocation19], 128
    %v1099 = vld [vmem:[%s1098] sm:$0xff]
    %v1100 = vld [vmem:[%s1098 + $0x8] sm:$0xff]
    %v1101 = vld [vmem:[%s1098 + $0x10] sm:$0xff]
    %v1102 = vld [vmem:[%s1098 + $0x18] sm:$0xff]
    %v1103 = vld [vmem:[%s1098 + $0x20] sm:$0xff]
    %v1104 = vld [vmem:[%s1098 + $0x28] sm:$0xff]
    %v1105 = vld [vmem:[%s1098 + $0x30] sm:$0xff]
    %v1106 = vld [vmem:[%s1098 + $0x38] sm:$0xff]
    %v1108 = vsel %vm1007, %v1093, 0
    %v1111 = vsel %vm1007, %v1096, 0
    %1113 = vmatpush.msra.mxu0 0.0
    %1114 = vmatpush.msra.mxu0 0.0
    %1115 = vmatpush.msra.mxu0 0.0
    %1116 = vmatpush.msra.mxu0 0.0
    %1117 = vmatpush.msra.mxu0 0.0
    %1118 = vmatpush.msra.mxu0 0.0
    %1119 = vmatpush.msra.mxu0 0.0
    %1120 = vmatpush.msra.mxu0 0.0
    %1121 = vmatpush.msra.mxu0 %v1106
    %1122 = vmatpush.msra.mxu0 %v1105
    %1123 = vmatpush.msra.mxu0 %v1104
    %1124 = vmatpush.msra.mxu0 %v1103
    %1125 = vmatpush.msra.mxu0 %v1102
    %1126 = vmatpush.msra.mxu0 %v1101
    %1127 = vmatpush.msra.mxu0 %v1100
    %1128 = vmatpush.msra.mxu0 %v1099
    %1129 = vmatmul.f32.gmra.mxu0 %v1108
    %v1130 = vpop.f32.mrf.mxu0
    %v1131 = vadd.f32 0.0, %v1130
    %1132 = vmatmul.f32.gmra.mxu0 %v1111
    %v1133 = vpop.f32.mrf.mxu0
    %v1134 = vadd.f32 0.0, %v1133
    %1135 = vdwg.mxu0
    %v1136 = vadd.f32 %v1061, %v1131
    %v1137 = vadd.f32 %v1064, %v1134
    %v1138 = vld [vmem:[%s12] sm:$0x1]
    %v1140 = vperm.slane %v1138, 0
    %v1142 = vadd.f32 %v1136, %v1140
    %v1143 = vadd.f32 %v1137, %v1140
    %v1144 = vmax.f32 %v1142, 0.0
    %v1145 = vmax.f32 %v1143, 0.0
    %v1147 = vsel %vm931, %v1145, 0
    %1149 = vmatpush.msra.mxu0 0.0
    %1150 = vmatpush.msra.mxu0 0.0
    %1151 = vmatpush.msra.mxu0 0.0
    %1152 = vmatpush.msra.mxu0 0.0
    %1153 = vmatpush.msra.mxu0 0.0
    %1154 = vmatpush.msra.mxu0 0.0
    %1155 = vmatpush.msra.mxu0 0.0
    %1156 = vmatpush.msra.mxu0 0.0
    %1157 = vmatpush.msra.mxu0 0.0
    %1158 = vmatpush.msra.mxu0 0.0
    %1159 = vmatpush.msra.mxu0 0.0
    %1160 = vmatpush.msra.mxu0 0.0
    %1161 = vmatpush.msra.mxu0 0.0
    %1162 = vmatpush.msra.mxu0 0.0
    %1163 = vmatpush.msra.mxu0 %v1147
    %1164 = vmatpush.msra.mxu0 %v1144
    %1165 = vmatmul.f32.gmra.mxu0 %v926
    %v1166 = vpop.f32.mrf.mxu0
    %v1167 = vadd.f32 0.0, %v1166
    %1168 = vmatmul.f32.gmra.mxu0 %v929
    %v1169 = vpop.f32.mrf.mxu0
    %v1170 = vadd.f32 0.0, %v1169
    %1171 = vdwg.mxu0
    %v1172 = vld [vmem:[#allocation20] sm:$0xff]
    %v1173 = vld [vmem:[#allocation20 + $0x8] sm:$0xff]
    %v1174 = vld [vmem:[#allocation20 + $0x10] sm:$0xff]
    %v1175 = vld [vmem:[#allocation20 + $0x18] sm:$0xff]
    %v1176 = vld [vmem:[#allocation20 + $0x20] sm:$0xff]
    %v1177 = vld [vmem:[#allocation20 + $0x28] sm:$0xff]
    %v1178 = vld [vmem:[#allocation20 + $0x30] sm:$0xff]
    %v1179 = vld [vmem:[#allocation20 + $0x38] sm:$0xff]
    %1180 = vmatpush.msra.mxu0 0.0
    %1181 = vmatpush.msra.mxu0 0.0
    %1182 = vmatpush.msra.mxu0 0.0
    %1183 = vmatpush.msra.mxu0 0.0
    %1184 = vmatpush.msra.mxu0 0.0
    %1185 = vmatpush.msra.mxu0 0.0
    %1186 = vmatpush.msra.mxu0 0.0
    %1187 = vmatpush.msra.mxu0 0.0
    %1188 = vmatpush.msra.mxu0 0.0
    %1189 = vmatpush.msra.mxu0 0.0
    %1190 = vmatpush.msra.mxu0 0.0
    %1191 = vmatpush.msra.mxu0 0.0
    %1192 = vmatpush.msra.mxu0 0.0
    %1193 = vmatpush.msra.mxu0 0.0
    %1194 = vmatpush.msra.mxu0 %v1147
    %1195 = vmatpush.msra.mxu0 %v1144
    %1196 = vmatmul.f32.gmra.mxu0 %v970
    %v1197 = vpop.f32.mrf.mxu0
    %v1198 = vadd.f32 0.0, %v1197
    %1199 = vmatmul.f32.gmra.mxu0 %v973
    %v1200 = vpop.f32.mrf.mxu0
    %v1201 = vadd.f32 0.0, %v1200
    %1202 = vdwg.mxu0
    %s1203 = scalar_lea.vmem [#allocation20], 64
    %v1204 = vld [vmem:[%s1203] sm:$0xff]
    %v1205 = vld [vmem:[%s1203 + $0x8] sm:$0xff]
    %v1206 = vld [vmem:[%s1203 + $0x10] sm:$0xff]
    %v1207 = vld [vmem:[%s1203 + $0x18] sm:$0xff]
    %v1208 = vld [vmem:[%s1203 + $0x20] sm:$0xff]
    %v1209 = vld [vmem:[%s1203 + $0x28] sm:$0xff]
    %v1210 = vld [vmem:[%s1203 + $0x30] sm:$0xff]
    %v1211 = vld [vmem:[%s1203 + $0x38] sm:$0xff]
    %v1213 = vsel %vm1007, %v1198, 0
    %v1216 = vsel %vm1007, %v1201, 0
    %1218 = vmatpush.msra.mxu0 0.0
    %1219 = vmatpush.msra.mxu0 0.0
    %1220 = vmatpush.msra.mxu0 0.0
    %1221 = vmatpush.msra.mxu0 0.0
    %1222 = vmatpush.msra.mxu0 0.0
    %1223 = vmatpush.msra.mxu0 0.0
    %1224 = vmatpush.msra.mxu0 0.0
    %1225 = vmatpush.msra.mxu0 0.0
    %1226 = vmatpush.msra.mxu0 %v1211
    %1227 = vmatpush.msra.mxu0 %v1210
    %1228 = vmatpush.msra.mxu0 %v1209
    %1229 = vmatpush.msra.mxu0 %v1208
    %1230 = vmatpush.msra.mxu0 %v1207
    %1231 = vmatpush.msra.mxu0 %v1206
    %1232 = vmatpush.msra.mxu0 %v1205
    %1233 = vmatpush.msra.mxu0 %v1204
    %1234 = vmatmul.f32.gmra.mxu0 %v1213
    %v1235 = vpop.f32.mrf.mxu0
    %v1236 = vadd.f32 0.0, %v1235
    %1237 = vmatmul.f32.gmra.mxu0 %v1216
    %v1238 = vpop.f32.mrf.mxu0
    %v1239 = vadd.f32 0.0, %v1238
    %1240 = vdwg.mxu0
    %v1242 = vsel %vm1007, %v1167, 0
    %v1245 = vsel %vm1007, %v1170, 0
    %1247 = vmatpush.msra.mxu0 0.0
    %1248 = vmatpush.msra.mxu0 0.0
    %1249 = vmatpush.msra.mxu0 0.0
    %1250 = vmatpush.msra.mxu0 0.0
    %1251 = vmatpush.msra.mxu0 0.0
    %1252 = vmatpush.msra.mxu0 0.0
    %1253 = vmatpush.msra.mxu0 0.0
    %1254 = vmatpush.msra.mxu0 0.0
    %1255 = vmatpush.msra.mxu0 %v1179
    %1256 = vmatpush.msra.mxu0 %v1178
    %1257 = vmatpush.msra.mxu0 %v1177
    %1258 = vmatpush.msra.mxu0 %v1176
    %1259 = vmatpush.msra.mxu0 %v1175
    %1260 = vmatpush.msra.mxu0 %v1174
    %1261 = vmatpush.msra.mxu0 %v1173
    %1262 = vmatpush.msra.mxu0 %v1172
    %1263 = vmatmul.f32.gmra.mxu0 %v1242
    %v1264 = vpop.f32.mrf.mxu0
    %v1265 = vadd.f32 %v1236, %v1264
    %1266 = vmatmul.f32.gmra.mxu0 %v1245
    %v1267 = vpop.f32.mrf.mxu0
    %v1268 = vadd.f32 %v1239, %v1267
    %1269 = vdwg.mxu0
    %1270 = vmatpush.msra.mxu0 0.0
    %1271 = vmatpush.msra.mxu0 0.0
    %1272 = vmatpush.msra.mxu0 0.0
    %1273 = vmatpush.msra.mxu0 0.0
    %1274 = vmatpush.msra.mxu0 0.0
    %1275 = vmatpush.msra.mxu0 0.0
    %1276 = vmatpush.msra.mxu0 0.0
    %1277 = vmatpush.msra.mxu0 0.0
    %1278 = vmatpush.msra.mxu0 0.0
    %1279 = vmatpush.msra.mxu0 0.0
    %1280 = vmatpush.msra.mxu0 0.0
    %1281 = vmatpush.msra.mxu0 0.0
    %1282 = vmatpush.msra.mxu0 0.0
    %1283 = vmatpush.msra.mxu0 0.0
    %1284 = vmatpush.msra.mxu0 %v1147
    %1285 = vmatpush.msra.mxu0 %v1144
    %1286 = vmatmul.f32.gmra.mxu0 %v1070
    %v1287 = vpop.f32.mrf.mxu0
    %v1288 = vadd.f32 0.0, %v1287
    %1289 = vmatmul.f32.gmra.mxu0 %v1073
    %v1290 = vpop.f32.mrf.mxu0
    %v1291 = vadd.f32 0.0, %v1290
    %1292 = vdwg.mxu0
    %s1293 = scalar_lea.vmem [#allocation20], 128
    %v1294 = vld [vmem:[%s1293] sm:$0xff]
    %v1295 = vld [vmem:[%s1293 + $0x8] sm:$0xff]
    %v1296 = vld [vmem:[%s1293 + $0x10] sm:$0xff]
    %v1297 = vld [vmem:[%s1293 + $0x18] sm:$0xff]
    %v1298 = vld [vmem:[%s1293 + $0x20] sm:$0xff]
    %v1299 = vld [vmem:[%s1293 + $0x28] sm:$0xff]
    %v1300 = vld [vmem:[%s1293 + $0x30] sm:$0xff]
    %v1301 = vld [vmem:[%s1293 + $0x38] sm:$0xff]
    %v1303 = vsel %vm1007, %v1288, 0
    %v1306 = vsel %vm1007, %v1291, 0
    %1308 = vmatpush.msra.mxu0 0.0
    %1309 = vmatpush.msra.mxu0 0.0
    %1310 = vmatpush.msra.mxu0 0.0
    %1311 = vmatpush.msra.mxu0 0.0
    %1312 = vmatpush.msra.mxu0 0.0
    %1313 = vmatpush.msra.mxu0 0.0
    %1314 = vmatpush.msra.mxu0 0.0
    %1315 = vmatpush.msra.mxu0 0.0
    %1316 = vmatpush.msra.mxu0 %v1301
    %1317 = vmatpush.msra.mxu0 %v1300
    %1318 = vmatpush.msra.mxu0 %v1299
    %1319 = vmatpush.msra.mxu0 %v1298
    %1320 = vmatpush.msra.mxu0 %v1297
    %1321 = vmatpush.msra.mxu0 %v1296
    %1322 = vmatpush.msra.mxu0 %v1295
    %1323 = vmatpush.msra.mxu0 %v1294
    %1324 = vmatmul.f32.gmra.mxu0 %v1303
    %v1325 = vpop.f32.mrf.mxu0
    %v1326 = vadd.f32 0.0, %v1325
    %1327 = vmatmul.f32.gmra.mxu0 %v1306
    %v1328 = vpop.f32.mrf.mxu0
    %v1329 = vadd.f32 0.0, %v1328
    %1330 = vdwg.mxu0
    %v1331 = vadd.f32 %v1265, %v1326
    %v1332 = vadd.f32 %v1268, %v1329
    %v1333 = vld [vmem:[%s14] sm:$0x1]
    %v1335 = vperm.slane %v1333, 0
    %v1337 = vadd.f32 %v1331, %v1335
    %v1338 = vadd.f32 %v1332, %v1335
    %v1339 = vmax.f32 %v1337, 0.0
    %v1340 = vmax.f32 %v1338, 0.0
    %v1341 = vadd.f32 %v920, %v1339
    %v1342 = vadd.f32 %v921, %v1340
    %v1344 = vsel %vm931, %v1342, 0
    %1346 = vmatpush.msra.mxu0 0.0
    %1347 = vmatpush.msra.mxu0 0.0
    %1348 = vmatpush.msra.mxu0 0.0
    %1349 = vmatpush.msra.mxu0 0.0
    %1350 = vmatpush.msra.mxu0 0.0
    %1351 = vmatpush.msra.mxu0 0.0
    %1352 = vmatpush.msra.mxu0 0.0
    %1353 = vmatpush.msra.mxu0 0.0
    %1354 = vmatpush.msra.mxu0 0.0
    %1355 = vmatpush.msra.mxu0 0.0
    %1356 = vmatpush.msra.mxu0 0.0
    %1357 = vmatpush.msra.mxu0 0.0
    %1358 = vmatpush.msra.mxu0 0.0
    %1359 = vmatpush.msra.mxu0 0.0
    %1360 = vmatpush.msra.mxu0 %v1344
    %1361 = vmatpush.msra.mxu0 %v1341
    %1362 = vmatmul.f32.gmra.mxu0 %v926
    %v1363 = vpop.f32.mrf.mxu0
    %v1364 = vadd.f32 0.0, %v1363
    %1365 = vmatmul.f32.gmra.mxu0 %v929
    %v1366 = vpop.f32.mrf.mxu0
    %v1367 = vadd.f32 0.0, %v1366
    %1368 = vdwg.mxu0
    %v1369 = vld [vmem:[#allocation22] sm:$0xff]
    %v1370 = vld [vmem:[#allocation22 + $0x8] sm:$0xff]
    %v1371 = vld [vmem:[#allocation22 + $0x10] sm:$0xff]
    %v1372 = vld [vmem:[#allocation22 + $0x18] sm:$0xff]
    %v1373 = vld [vmem:[#allocation22 + $0x20] sm:$0xff]
    %v1374 = vld [vmem:[#allocation22 + $0x28] sm:$0xff]
    %v1375 = vld [vmem:[#allocation22 + $0x30] sm:$0xff]
    %v1376 = vld [vmem:[#allocation22 + $0x38] sm:$0xff]
    %1377 = vmatpush.msra.mxu0 0.0
    %1378 = vmatpush.msra.mxu0 0.0
    %1379 = vmatpush.msra.mxu0 0.0
    %1380 = vmatpush.msra.mxu0 0.0
    %1381 = vmatpush.msra.mxu0 0.0
    %1382 = vmatpush.msra.mxu0 0.0
    %1383 = vmatpush.msra.mxu0 0.0
    %1384 = vmatpush.msra.mxu0 0.0
    %1385 = vmatpush.msra.mxu0 0.0
    %1386 = vmatpush.msra.mxu0 0.0
    %1387 = vmatpush.msra.mxu0 0.0
    %1388 = vmatpush.msra.mxu0 0.0
    %1389 = vmatpush.msra.mxu0 0.0
    %1390 = vmatpush.msra.mxu0 0.0
    %1391 = vmatpush.msra.mxu0 %v1344
    %1392 = vmatpush.msra.mxu0 %v1341
    %1393 = vmatmul.f32.gmra.mxu0 %v970
    %v1394 = vpop.f32.mrf.mxu0
    %v1395 = vadd.f32 0.0, %v1394
    %1396 = vmatmul.f32.gmra.mxu0 %v973
    %v1397 = vpop.f32.mrf.mxu0
    %v1398 = vadd.f32 0.0, %v1397
    %1399 = vdwg.mxu0
    %s1400 = scalar_lea.vmem [#allocation22], 64
    %v1401 = vld [vmem:[%s1400] sm:$0xff]
    %v1402 = vld [vmem:[%s1400 + $0x8] sm:$0xff]
    %v1403 = vld [vmem:[%s1400 + $0x10] sm:$0xff]
    %v1404 = vld [vmem:[%s1400 + $0x18] sm:$0xff]
    %v1405 = vld [vmem:[%s1400 + $0x20] sm:$0xff]
    %v1406 = vld [vmem:[%s1400 + $0x28] sm:$0xff]
    %v1407 = vld [vmem:[%s1400 + $0x30] sm:$0xff]
    %v1408 = vld [vmem:[%s1400 + $0x38] sm:$0xff]
    %v1410 = vsel %vm1007, %v1395, 0
    %v1413 = vsel %vm1007, %v1398, 0
    %1415 = vmatpush.msra.mxu0 0.0
    %1416 = vmatpush.msra.mxu0 0.0
    %1417 = vmatpush.msra.mxu0 0.0
    %1418 = vmatpush.msra.mxu0 0.0
    %1419 = vmatpush.msra.mxu0 0.0
    %1420 = vmatpush.msra.mxu0 0.0
    %1421 = vmatpush.msra.mxu0 0.0
    %1422 = vmatpush.msra.mxu0 0.0
    %1423 = vmatpush.msra.mxu0 %v1408
    %1424 = vmatpush.msra.mxu0 %v1407
    %1425 = vmatpush.msra.mxu0 %v1406
    %1426 = vmatpush.msra.mxu0 %v1405
    %1427 = vmatpush.msra.mxu0 %v1404
    %1428 = vmatpush.msra.mxu0 %v1403
    %1429 = vmatpush.msra.mxu0 %v1402
    %1430 = vmatpush.msra.mxu0 %v1401
    %1431 = vmatmul.f32.gmra.mxu0 %v1410
    %v1432 = vpop.f32.mrf.mxu0
    %v1433 = vadd.f32 0.0, %v1432
    %1434 = vmatmul.f32.gmra.mxu0 %v1413
    %v1435 = vpop.f32.mrf.mxu0
    %v1436 = vadd.f32 0.0, %v1435
    %1437 = vdwg.mxu0
    %v1439 = vsel %vm1007, %v1364, 0
    %v1442 = vsel %vm1007, %v1367, 0
    %1444 = vmatpush.msra.mxu0 0.0
    %1445 = vmatpush.msra.mxu0 0.0
    %1446 = vmatpush.msra.mxu0 0.0
    %1447 = vmatpush.msra.mxu0 0.0
    %1448 = vmatpush.msra.mxu0 0.0
    %1449 = vmatpush.msra.mxu0 0.0
    %1450 = vmatpush.msra.mxu0 0.0
    %1451 = vmatpush.msra.mxu0 0.0
    %1452 = vmatpush.msra.mxu0 %v1376
    %1453 = vmatpush.msra.mxu0 %v1375
    %1454 = vmatpush.msra.mxu0 %v1374
    %1455 = vmatpush.msra.mxu0 %v1373
    %1456 = vmatpush.msra.mxu0 %v1372
    %1457 = vmatpush.msra.mxu0 %v1371
    %1458 = vmatpush.msra.mxu0 %v1370
    %1459 = vmatpush.msra.mxu0 %v1369
    %1460 = vmatmul.f32.gmra.mxu0 %v1439
    %v1461 = vpop.f32.mrf.mxu0
    %v1462 = vadd.f32 %v1433, %v1461
    %1463 = vmatmul.f32.gmra.mxu0 %v1442
    %v1464 = vpop.f32.mrf.mxu0
    %v1465 = vadd.f32 %v1436, %v1464
    %1466 = vdwg.mxu0
    %1467 = vmatpush.msra.mxu0 0.0
    %1468 = vmatpush.msra.mxu0 0.0
    %1469 = vmatpush.msra.mxu0 0.0
    %1470 = vmatpush.msra.mxu0 0.0
    %1471 = vmatpush.msra.mxu0 0.0
    %1472 = vmatpush.msra.mxu0 0.0
    %1473 = vmatpush.msra.mxu0 0.0
    %1474 = vmatpush.msra.mxu0 0.0
    %1475 = vmatpush.msra.mxu0 0.0
    %1476 = vmatpush.msra.mxu0 0.0
    %1477 = vmatpush.msra.mxu0 0.0
    %1478 = vmatpush.msra.mxu0 0.0
    %1479 = vmatpush.msra.mxu0 0.0
    %1480 = vmatpush.msra.mxu0 0.0
    %1481 = vmatpush.msra.mxu0 %v1344
    %1482 = vmatpush.msra.mxu0 %v1341
    %1483 = vmatmul.f32.gmra.mxu0 %v1070
    %v1484 = vpop.f32.mrf.mxu0
    %v1485 = vadd.f32 0.0, %v1484
    %1486 = vmatmul.f32.gmra.mxu0 %v1073
    %v1487 = vpop.f32.mrf.mxu0
    %v1488 = vadd.f32 0.0, %v1487
    %1489 = vdwg.mxu0
    %s1490 = scalar_lea.vmem [#allocation22], 128
    %v1491 = vld [vmem:[%s1490] sm:$0xff]
    %v1492 = vld [vmem:[%s1490 + $0x8] sm:$0xff]
    %v1493 = vld [vmem:[%s1490 + $0x10] sm:$0xff]
    %v1494 = vld [vmem:[%s1490 + $0x18] sm:$0xff]
    %v1495 = vld [vmem:[%s1490 + $0x20] sm:$0xff]
    %v1496 = vld [vmem:[%s1490 + $0x28] sm:$0xff]
    %v1497 = vld [vmem:[%s1490 + $0x30] sm:$0xff]
    %v1498 = vld [vmem:[%s1490 + $0x38] sm:$0xff]
    %v1500 = vsel %vm1007, %v1485, 0
    %v1503 = vsel %vm1007, %v1488, 0
    %1505 = vmatpush.msra.mxu0 0.0
    %1506 = vmatpush.msra.mxu0 0.0
    %1507 = vmatpush.msra.mxu0 0.0
    %1508 = vmatpush.msra.mxu0 0.0
    %1509 = vmatpush.msra.mxu0 0.0
    %1510 = vmatpush.msra.mxu0 0.0
    %1511 = vmatpush.msra.mxu0 0.0
    %1512 = vmatpush.msra.mxu0 0.0
    %1513 = vmatpush.msra.mxu0 %v1498
    %1514 = vmatpush.msra.mxu0 %v1497
    %1515 = vmatpush.msra.mxu0 %v1496
    %1516 = vmatpush.msra.mxu0 %v1495
    %1517 = vmatpush.msra.mxu0 %v1494
    %1518 = vmatpush.msra.mxu0 %v1493
    %1519 = vmatpush.msra.mxu0 %v1492
    %1520 = vmatpush.msra.mxu0 %v1491
    %1521 = vmatmul.f32.gmra.mxu0 %v1500
    %v1522 = vpop.f32.mrf.mxu0
    %v1523 = vadd.f32 0.0, %v1522
    %1524 = vmatmul.f32.gmra.mxu0 %v1503
    %v1525 = vpop.f32.mrf.mxu0
    %v1526 = vadd.f32 0.0, %v1525
    %1527 = vdwg.mxu0
    %v1528 = vadd.f32 %v1462, %v1523
    %v1529 = vadd.f32 %v1465, %v1526
    %v1530 = vld [vmem:[%s16] sm:$0x1]
    %v1532 = vperm.slane %v1530, 0
    %v1534 = vadd.f32 %v1528, %v1532
    %v1535 = vadd.f32 %v1529, %v1532
    %v1536 = vmax.f32 %v1534, 0.0
    %v1537 = vmax.f32 %v1535, 0.0
    %v1539 = vsel %vm931, %v1537, 0
    %1541 = vmatpush.msra.mxu0 0.0
    %1542 = vmatpush.msra.mxu0 0.0
    %1543 = vmatpush.msra.mxu0 0.0
    %1544 = vmatpush.msra.mxu0 0.0
    %1545 = vmatpush.msra.mxu0 0.0
    %1546 = vmatpush.msra.mxu0 0.0
    %1547 = vmatpush.msra.mxu0 0.0
    %1548 = vmatpush.msra.mxu0 0.0
    %1549 = vmatpush.msra.mxu0 0.0
    %1550 = vmatpush.msra.mxu0 0.0
    %1551 = vmatpush.msra.mxu0 0.0
    %1552 = vmatpush.msra.mxu0 0.0
    %1553 = vmatpush.msra.mxu0 0.0
    %1554 = vmatpush.msra.mxu0 0.0
    %1555 = vmatpush.msra.mxu0 %v1539
    %1556 = vmatpush.msra.mxu0 %v1536
    %1557 = vmatmul.f32.gmra.mxu0 %v926
    %v1558 = vpop.f32.mrf.mxu0
    %v1559 = vadd.f32 0.0, %v1558
    %1560 = vmatmul.f32.gmra.mxu0 %v929
    %v1561 = vpop.f32.mrf.mxu0
    %v1562 = vadd.f32 0.0, %v1561
    %1563 = vdwg.mxu0
    %v1564 = vld [vmem:[#allocation23] sm:$0xff]
    %v1565 = vld [vmem:[#allocation23 + $0x8] sm:$0xff]
    %v1566 = vld [vmem:[#allocation23 + $0x10] sm:$0xff]
    %v1567 = vld [vmem:[#allocation23 + $0x18] sm:$0xff]
    %v1568 = vld [vmem:[#allocation23 + $0x20] sm:$0xff]
    %v1569 = vld [vmem:[#allocation23 + $0x28] sm:$0xff]
    %v1570 = vld [vmem:[#allocation23 + $0x30] sm:$0xff]
    %v1571 = vld [vmem:[#allocation23 + $0x38] sm:$0xff]
    %v1572 = vld [vmem:[#allocation23 + $0x40] sm:$0xff]
    %v1573 = vld [vmem:[#allocation23 + $0x48] sm:$0xff]
    %v1574 = vld [vmem:[#allocation23 + $0x50] sm:$0xff]
    %v1575 = vld [vmem:[#allocation23 + $0x58] sm:$0xff]
    %v1576 = vld [vmem:[#allocation23 + $0x60] sm:$0xff]
    %v1577 = vld [vmem:[#allocation23 + $0x68] sm:$0xff]
    %v1578 = vld [vmem:[#allocation23 + $0x70] sm:$0xff]
    %v1579 = vld [vmem:[#allocation23 + $0x78] sm:$0xff]
    %1580 = vmatpush.msra.mxu0 0.0
    %1581 = vmatpush.msra.mxu0 0.0
    %1582 = vmatpush.msra.mxu0 0.0
    %1583 = vmatpush.msra.mxu0 0.0
    %1584 = vmatpush.msra.mxu0 0.0
    %1585 = vmatpush.msra.mxu0 0.0
    %1586 = vmatpush.msra.mxu0 0.0
    %1587 = vmatpush.msra.mxu0 0.0
    %1588 = vmatpush.msra.mxu0 0.0
    %1589 = vmatpush.msra.mxu0 0.0
    %1590 = vmatpush.msra.mxu0 0.0
    %1591 = vmatpush.msra.mxu0 0.0
    %1592 = vmatpush.msra.mxu0 0.0
    %1593 = vmatpush.msra.mxu0 0.0
    %1594 = vmatpush.msra.mxu0 %v1539
    %1595 = vmatpush.msra.mxu0 %v1536
    %1596 = vmatmul.f32.gmra.mxu0 %v970
    %v1597 = vpop.f32.mrf.mxu0
    %v1598 = vadd.f32 0.0, %v1597
    %1599 = vmatmul.f32.gmra.mxu0 %v973
    %v1600 = vpop.f32.mrf.mxu0
    %v1601 = vadd.f32 0.0, %v1600
    %1602 = vdwg.mxu0
    %s1603 = scalar_lea.vmem [#allocation23], 128
    %v1604 = vld [vmem:[%s1603] sm:$0xff]
    %v1605 = vld [vmem:[%s1603 + $0x8] sm:$0xff]
    %v1606 = vld [vmem:[%s1603 + $0x10] sm:$0xff]
    %v1607 = vld [vmem:[%s1603 + $0x18] sm:$0xff]
    %v1608 = vld [vmem:[%s1603 + $0x20] sm:$0xff]
    %v1609 = vld [vmem:[%s1603 + $0x28] sm:$0xff]
    %v1610 = vld [vmem:[%s1603 + $0x30] sm:$0xff]
    %v1611 = vld [vmem:[%s1603 + $0x38] sm:$0xff]
    %v1612 = vld [vmem:[%s1603 + $0x40] sm:$0xff]
    %v1613 = vld [vmem:[%s1603 + $0x48] sm:$0xff]
    %v1614 = vld [vmem:[%s1603 + $0x50] sm:$0xff]
    %v1615 = vld [vmem:[%s1603 + $0x58] sm:$0xff]
    %v1616 = vld [vmem:[%s1603 + $0x60] sm:$0xff]
    %v1617 = vld [vmem:[%s1603 + $0x68] sm:$0xff]
    %v1618 = vld [vmem:[%s1603 + $0x70] sm:$0xff]
    %v1619 = vld [vmem:[%s1603 + $0x78] sm:$0xff]
    %1620 = vmatpush.msra.mxu0 %v1619
    %1621 = vmatpush.msra.mxu0 %v1618
    %1622 = vmatpush.msra.mxu0 %v1617
    %1623 = vmatpush.msra.mxu0 %v1616
    %1624 = vmatpush.msra.mxu0 %v1615
    %1625 = vmatpush.msra.mxu0 %v1614
    %1626 = vmatpush.msra.mxu0 %v1613
    %1627 = vmatpush.msra.mxu0 %v1612
    %1628 = vmatpush.msra.mxu0 %v1611
    %1629 = vmatpush.msra.mxu0 %v1610
    %1630 = vmatpush.msra.mxu0 %v1609
    %1631 = vmatpush.msra.mxu0 %v1608
    %1632 = vmatpush.msra.mxu0 %v1607
    %1633 = vmatpush.msra.mxu0 %v1606
    %1634 = vmatpush.msra.mxu0 %v1605
    %1635 = vmatpush.msra.mxu0 %v1604
    %1636 = vmatmul.f32.gmra.mxu0 %v1598
    %v1637 = vpop.f32.mrf.mxu0
    %v1638 = vadd.f32 0.0, %v1637
    %1639 = vmatmul.f32.gmra.mxu0 %v1601
    %v1640 = vpop.f32.mrf.mxu0
    %v1641 = vadd.f32 0.0, %v1640
    %1642 = vdwg.mxu0
    %1643 = vmatpush.msra.mxu0 %v1579
    %1644 = vmatpush.msra.mxu0 %v1578
    %1645 = vmatpush.msra.mxu0 %v1577
    %1646 = vmatpush.msra.mxu0 %v1576
    %1647 = vmatpush.msra.mxu0 %v1575
    %1648 = vmatpush.msra.mxu0 %v1574
    %1649 = vmatpush.msra.mxu0 %v1573
    %1650 = vmatpush.msra.mxu0 %v1572
    %1651 = vmatpush.msra.mxu0 %v1571
    %1652 = vmatpush.msra.mxu0 %v1570
    %1653 = vmatpush.msra.mxu0 %v1569
    %1654 = vmatpush.msra.mxu0 %v1568
    %1655 = vmatpush.msra.mxu0 %v1567
    %1656 = vmatpush.msra.mxu0 %v1566
    %1657 = vmatpush.msra.mxu0 %v1565
    %1658 = vmatpush.msra.mxu0 %v1564
    %1659 = vmatmul.f32.gmra.mxu0 %v1559
    %v1660 = vpop.f32.mrf.mxu0
    %v1661 = vadd.f32 %v1638, %v1660
    %1662 = vmatmul.f32.gmra.mxu0 %v1562
    %v1663 = vpop.f32.mrf.mxu0
    %v1664 = vadd.f32 %v1641, %v1663
    %1665 = vdwg.mxu0
    %1666 = vmatpush.msra.mxu0 0.0
    %1667 = vmatpush.msra.mxu0 0.0
    %1668 = vmatpush.msra.mxu0 0.0
    %1669 = vmatpush.msra.mxu0 0.0
    %1670 = vmatpush.msra.mxu0 0.0
    %1671 = vmatpush.msra.mxu0 0.0
    %1672 = vmatpush.msra.mxu0 0.0
    %1673 = vmatpush.msra.mxu0 0.0
    %1674 = vmatpush.msra.mxu0 0.0
    %1675 = vmatpush.msra.mxu0 0.0
    %1676 = vmatpush.msra.mxu0 0.0
    %1677 = vmatpush.msra.mxu0 0.0
    %1678 = vmatpush.msra.mxu0 0.0
    %1679 = vmatpush.msra.mxu0 0.0
    %1680 = vmatpush.msra.mxu0 %v1539
    %1681 = vmatpush.msra.mxu0 %v1536
    %1682 = vmatmul.f32.gmra.mxu0 %v1070
    %v1683 = vpop.f32.mrf.mxu0
    %v1684 = vadd.f32 0.0, %v1683
    %1685 = vmatmul.f32.gmra.mxu0 %v1073
    %v1686 = vpop.f32.mrf.mxu0
    %v1687 = vadd.f32 0.0, %v1686
    %1688 = vdwg.mxu0
    %s1689 = scalar_lea.vmem [#allocation23], 256
    %v1690 = vld [vmem:[%s1689] sm:$0xff]
    %v1691 = vld [vmem:[%s1689 + $0x8] sm:$0xff]
    %v1692 = vld [vmem:[%s1689 + $0x10] sm:$0xff]
    %v1693 = vld [vmem:[%s1689 + $0x18] sm:$0xff]
    %v1694 = vld [vmem:[%s1689 + $0x20] sm:$0xff]
    %v1695 = vld [vmem:[%s1689 + $0x28] sm:$0xff]
    %v1696 = vld [vmem:[%s1689 + $0x30] sm:$0xff]
    %v1697 = vld [vmem:[%s1689 + $0x38] sm:$0xff]
    %v1698 = vld [vmem:[%s1689 + $0x40] sm:$0xff]
    %v1699 = vld [vmem:[%s1689 + $0x48] sm:$0xff]
    %v1700 = vld [vmem:[%s1689 + $0x50] sm:$0xff]
    %v1701 = vld [vmem:[%s1689 + $0x58] sm:$0xff]
    %v1702 = vld [vmem:[%s1689 + $0x60] sm:$0xff]
    %v1703 = vld [vmem:[%s1689 + $0x68] sm:$0xff]
    %v1704 = vld [vmem:[%s1689 + $0x70] sm:$0xff]
    %v1705 = vld [vmem:[%s1689 + $0x78] sm:$0xff]
    %1706 = vmatpush.msra.mxu0 %v1705
    %1707 = vmatpush.msra.mxu0 %v1704
    %1708 = vmatpush.msra.mxu0 %v1703
    %1709 = vmatpush.msra.mxu0 %v1702
    %1710 = vmatpush.msra.mxu0 %v1701
    %1711 = vmatpush.msra.mxu0 %v1700
    %1712 = vmatpush.msra.mxu0 %v1699
    %1713 = vmatpush.msra.mxu0 %v1698
    %1714 = vmatpush.msra.mxu0 %v1697
    %1715 = vmatpush.msra.mxu0 %v1696
    %1716 = vmatpush.msra.mxu0 %v1695
    %1717 = vmatpush.msra.mxu0 %v1694
    %1718 = vmatpush.msra.mxu0 %v1693
    %1719 = vmatpush.msra.mxu0 %v1692
    %1720 = vmatpush.msra.mxu0 %v1691
    %1721 = vmatpush.msra.mxu0 %v1690
    %1722 = vmatmul.f32.gmra.mxu0 %v1684
    %v1723 = vpop.f32.mrf.mxu0
    %v1724 = vadd.f32 0.0, %v1723
    %1725 = vmatmul.f32.gmra.mxu0 %v1687
    %v1726 = vpop.f32.mrf.mxu0
    %v1727 = vadd.f32 0.0, %v1726
    %1728 = vdwg.mxu0
    %v1729 = vadd.f32 %v1661, %v1724
    %v1730 = vadd.f32 %v1664, %v1727
    %v1731 = vld [vmem:[%s18] sm:$0x1]
    %v1733 = vperm.slane %v1731, 0
    %v1735 = vadd.f32 %v1729, %v1733
    %v1736 = vadd.f32 %v1730, %v1733
    %v1737 = vmax.f32 %v1735, 0.0
    %v1738 = vmax.f32 %v1736, 0.0
    %v1739 = vld [vmem:[%s19] sm:$0x3]
    %v1741 = vsel %vm924, %v1739, 0
    %v1744 = vsel %vm931, %v1738, 0
    %1746 = vmatpush.msra.mxu0 0.0
    %1747 = vmatpush.msra.mxu0 0.0
    %1748 = vmatpush.msra.mxu0 0.0
    %1749 = vmatpush.msra.mxu0 0.0
    %1750 = vmatpush.msra.mxu0 0.0
    %1751 = vmatpush.msra.mxu0 0.0
    %1752 = vmatpush.msra.mxu0 0.0
    %1753 = vmatpush.msra.mxu0 0.0
    %1754 = vmatpush.msra.mxu0 0.0
    %1755 = vmatpush.msra.mxu0 0.0
    %1756 = vmatpush.msra.mxu0 0.0
    %1757 = vmatpush.msra.mxu0 0.0
    %1758 = vmatpush.msra.mxu0 0.0
    %1759 = vmatpush.msra.mxu0 0.0
    %1760 = vmatpush.msra.mxu0 %v1744
    %1761 = vmatpush.msra.mxu0 %v1737
    %1762 = vmatmul.f32.gmra.mxu0 %v1741
    %v1763 = vpop.f32.mrf.mxu0
    %v1764 = vadd.f32 0.0, %v1763
    %1765 = vdwg.mxu0
    %v1766 = vld [vmem:[#allocation25] sm:$0xff]
    %v1767 = vld [vmem:[#allocation25 + $0x8] sm:$0xff]
    %v1768 = vld [vmem:[#allocation25 + $0x10] sm:$0xff]
    %v1769 = vld [vmem:[#allocation25 + $0x18] sm:$0xff]
    %v1770 = vld [vmem:[#allocation25 + $0x20] sm:$0xff]
    %v1771 = vld [vmem:[#allocation25 + $0x28] sm:$0xff]
    %v1772 = vld [vmem:[#allocation25 + $0x30] sm:$0xff]
    %v1773 = vld [vmem:[#allocation25 + $0x38] sm:$0xff]
    %v1774 = vld [vmem:[#allocation25 + $0x40] sm:$0xff]
    %v1775 = vld [vmem:[#allocation25 + $0x48] sm:$0xff]
    %v1776 = vld [vmem:[#allocation25 + $0x50] sm:$0xff]
    %v1777 = vld [vmem:[#allocation25 + $0x58] sm:$0xff]
    %v1778 = vld [vmem:[#allocation25 + $0x60] sm:$0xff]
    %v1779 = vld [vmem:[#allocation25 + $0x68] sm:$0xff]
    %v1780 = vld [vmem:[#allocation25 + $0x70] sm:$0xff]
    %v1781 = vld [vmem:[#allocation25 + $0x78] sm:$0xff]
    %v1782 = vld [vmem:[%s21] sm:$0x1]
    %v1784 = vperm.slane %v1782, 0
    %1786 = vmatpush.msra.mxu0 %v1781
    %1787 = vmatpush.msra.mxu0 %v1780
    %1788 = vmatpush.msra.mxu0 %v1779
    %1789 = vmatpush.msra.mxu0 %v1778
    %1790 = vmatpush.msra.mxu0 %v1777
    %1791 = vmatpush.msra.mxu0 %v1776
    %1792 = vmatpush.msra.mxu0 %v1775
    %1793 = vmatpush.msra.mxu0 %v1774
    %1794 = vmatpush.msra.mxu0 %v1773
    %1795 = vmatpush.msra.mxu0 %v1772
    %1796 = vmatpush.msra.mxu0 %v1771
    %1797 = vmatpush.msra.mxu0 %v1770
    %1798 = vmatpush.msra.mxu0 %v1769
    %1799 = vmatpush.msra.mxu0 %v1768
    %1800 = vmatpush.msra.mxu0 %v1767
    %1801 = vmatpush.msra.mxu0 %v1766
    %1802 = vmatmul.f32.gmra.mxu0 %v1764
    %v1803 = vpop.f32.mrf.mxu0
    %v1804 = vadd.f32 %v1784, %v1803
    %1805 = vdwg.mxu0
    %vm1806 = vcmask 156672
    %1807 = vst.msk [vmem:[#allocation26] sm:$0x3] %vm1806, %v1804
    // Predicated region
    $region150: #{t3cnn_forward.1} parent=1 // pred_check
      _
    $region151: #{t3cnn_forward.1} parent=1 // pred_check_branch
      %1809 = sbr.rel (0) target = $region153
    $region152: #{t3cnn_forward.1} parent=1 // pred_region
      %1811 = vsyncadd [#allocation4], 0
      %s1813 = sshll.u32 [#allocation26], 4
      %s1814 = int_to_ptr.vmem [resolvable:$true] %s1813
      %s1815 = sshll.u32 %s22, 4
      %s1816 = int_to_ptr.hbm [resolvable:$true] %s1815
      %1818 = dma.vmem_to_hbm [thread:$0]  %s1814, 32, %s1816, [#allocation4]
    $region153: #{t3cnn_forward.1} parent=1 // pred_fallthru
      _
    // Predicated region
    $region154: #{t3cnn_forward.1} parent=1 // pred_check
      _
    $region155: #{t3cnn_forward.1} parent=1 // pred_check_branch
      %1820 = sbr.rel (0) target = $region157
    $region156: #{t3cnn_forward.1} parent=1 // pred_region
      %1822 = dma.done [#allocation4], 32
    $region157: #{t3cnn_forward.1} parent=1 // pred_fallthru
      _
    %1823 = vsyncpa [#allocation3], 1
    %1824 = vsyncpa [#allocation6], 1
    %1825 = vsyncpa [#allocation9], 1
    %1826 = vsyncpa [#allocation12], 1
    %1827 = vsyncpa [#allocation15], 1
    %1828 = vsyncpa [#allocation18], 1
    %1829 = vsyncpa [#allocation21], 1
    %1830 = vsyncpa [#allocation24], 1
    %1831 = vsyncpa [#allocation4], 1

</llo_original>
